<compile_context>
chip_gen: v6e
topology: v6e:2x2x1
jax: 0.10.0
libtpu: 0.0.40
codegen_flags: <defaults>
</compile_context>

<pallas_src>
import functools
import math

import jax
import jax.numpy as jnp
from jax.experimental import pallas as pl
from jax.experimental.pallas import tpu as pltpu


# ----------------------------- fused kernel -------------------------------- #

def _layernorm_f32(x, g, b, eps):
    """Single-pass LayerNorm: one pair of independent lane reductions."""
    n = x.shape[-1]
    s1 = jnp.sum(x, axis=-1, keepdims=True)
    s2 = jnp.sum(x * x, axis=-1, keepdims=True)
    mean = s1 / n
    var = s2 / n - mean * mean
    return (x - mean) * jax.lax.rsqrt(var + eps) * g + b


def _encoder_layer_kernel(
    src_ref, emb_ref,
    wqk_ref, bqk_ref, wv_ref, bv_ref,
    wo_ref, bo_ref,
    g1_ref, beta1_ref,
    w1_ref, b1_ref, w2_ref, b2_ref,
    g2_ref, beta2_ref,
    out_ref,
    *, H, hd, scale, eps):
    f32 = jnp.float32
    bf16 = jnp.bfloat16

    S, D = src_ref.shape                              # per-batch tile (S, D)

    src = src_ref[...].astype(f32)                    # (S, D)
    pos = src + emb_ref[...].astype(f32)              # fused pos-embedding add
    pos_b = pos.astype(bf16)
    src_b = src.astype(bf16)

    # --- transposed in-projections (features on sublanes, S on lanes) ------ #
    # qkT[f, s] = sum_d wqk[f, d] * pos[s, d]    -> (2D, S)
    qkT = jax.lax.dot_general(wqk_ref[...], pos_b,
                              (((1,), (1,)), ((), ())),
                              preferred_element_type=f32) + bqk_ref[...]
    # vT[f, s]  = sum_d wv[f, d] * src[s, d]     -> (D, S)
    vT = jax.lax.dot_general(wv_ref[...], src_b,
                             (((1,), (1,)), ((), ())),
                             preferred_element_type=f32) + bv_ref[...]

    # Free leading-dim reshapes: heads on the outer/sublane axes, S on lanes.
    qkh = qkT.reshape(2 * H, hd, S)
    qh = qkh[:H].astype(bf16)                         # (H, hd, S)
    kh = qkh[H:].astype(bf16)                         # (H, hd, S)
    vh = vT.reshape(H, hd, S).astype(bf16)            # (H, hd, S)

    # --- head-batched attention (batch dim = head) -------------------------- #
    # scores[h, s, t] = sum_d q[s, h, d] * k[t, h, d]
    scores = jax.lax.dot_general(
        qh, kh, (((1,), (1,)), ((0,), (0,))),
        preferred_element_type=f32) * scale           # (H, S, S)
    m = jnp.max(scores, axis=-1, keepdims=True)
    p = jnp.exp(scores - m)
    l = jnp.sum(p, axis=-1, keepdims=True)
    p = p / l                                         # exact softmax in f32

    # ohT[h, d, s] = sum_t v[t, h, d] * p[h, s, t]   -> (H, hd, S)
    ohT = jax.lax.dot_general(
        vh, p.astype(bf16), (((2,), (2,)), ((0,), (0,))),
        preferred_element_type=f32)
    attnT = ohT.reshape(D, S)                         # heads merged, free

    # --- output projection back to (S, D) ----------------------------------- #
    # attn_out[s, o] = sum_d attnT[d, s] * wo[o, d]  = (attn @ wo.T)[s, o]
    attn_out = jax.lax.dot_general(
        attnT.astype(bf16), wo_ref[...],
        (((0,), (1,)), ((), ())),
        preferred_element_type=f32) + bo_ref[...]     # (S, D)

    # residual + LayerNorm1 (dropout1 = identity)
    h1 = _layernorm_f32(src + attn_out, g1_ref[...], beta1_ref[...], eps)

    # --- FFN: linear1 -> ReLU -> linear2 (intermediate never leaves vregs) --- #
    ff = jax.lax.dot_general(h1.astype(bf16), w1_ref[...],
                             (((1,), (1,)), ((), ())),
                             preferred_element_type=f32) + b1_ref[...]
    ff = jnp.maximum(ff, 0.0)
    ff2 = jax.lax.dot_general(ff.astype(bf16), w2_ref[...],
                              (((1,), (1,)), ((), ())),
                              preferred_element_type=f32) + b2_ref[...]

    # residual + LayerNorm2, single lane-dense (S, D) store.
    out_ref[...] = _layernorm_f32(h1 + ff2, g2_ref[...], beta2_ref[...],
                                  eps).astype(out_ref.dtype)


# --------------------------- forward (wrapper) ------------------------------ #

def transformer_encoder_layer(src, src_embed, params):
    """src, src_embed: (S, B, D) float32. Returns (S, B, D)."""
    S, B, D = src.shape
    H = params["nhead"]
    hd = D // H
    dim_ff = params["lin1_weight"].shape[0]
    scale = 1.0 / math.sqrt(hd)
    bf16 = jnp.bfloat16

    # (S, B, D) -> (B, S, D): per-batch contiguous (S, D) tiles for BlockSpec.
    src_b = jnp.transpose(src, (1, 0, 2))
    emb_b = jnp.transpose(src_embed, (1, 0, 2))

    # Stacked [q|k] in-projection weight (PyTorch layout (3D, D)); v separate.
    w_in = params["in_proj_weight"]
    b_in = params["in_proj_bias"]
    wqk = w_in[: 2 * D].astype(bf16)                  # (2D, D)
    bqk = b_in[: 2 * D].reshape(2 * D, 1)             # column bias (transposed layout)
    wv = w_in[2 * D:].astype(bf16)                    # (D, D)
    bv = b_in[2 * D:].reshape(D, 1)

    kernel = functools.partial(
        _encoder_layer_kernel, H=H, hd=hd, scale=scale, eps=1e-5)

    const2d = lambda b: (0, 0)                        # weights: load once, stay resident
    batch3d = lambda b: (b, 0, 0)

    in_specs = [
        pl.BlockSpec((None, S, D), batch3d),          # src    (B, S, D)
        pl.BlockSpec((None, S, D), batch3d),          # embed  (B, S, D)
        pl.BlockSpec((2 * D, D), const2d),            # wqk    bf16
        pl.BlockSpec((2 * D, 1), const2d),            # bqk
        pl.BlockSpec((D, D), const2d),                # wv     bf16
        pl.BlockSpec((D, 1), const2d),                # bv
        pl.BlockSpec((D, D), const2d),                # wo     bf16
        pl.BlockSpec((1, D), const2d),                # bo
        pl.BlockSpec((1, D), const2d),                # ln1 gamma
        pl.BlockSpec((1, D), const2d),                # ln1 beta
        pl.BlockSpec((dim_ff, D), const2d),           # w1     bf16
        pl.BlockSpec((1, dim_ff), const2d),           # b1
        pl.BlockSpec((D, dim_ff), const2d),           # w2     bf16
        pl.BlockSpec((1, D), const2d),                # b2
        pl.BlockSpec((1, D), const2d),                # ln2 gamma
        pl.BlockSpec((1, D), const2d),                # ln2 beta
    ]
    out_specs = pl.BlockSpec((None, S, D), batch3d)

    out = pl.pallas_call(
        kernel,
        out_shape=jax.ShapeDtypeStruct((B, S, D), src.dtype),
        grid=(B,),
        in_specs=in_specs,
        out_specs=out_specs,
        compiler_params=pltpu.CompilerParams(
            dimension_semantics=("parallel",)),       # 2 TCs on v7x
    )(
        src_b, emb_b,
        wqk, bqk, wv, bv,
        params["out_proj_weight"].astype(bf16), params["out_proj_bias"].reshape(1, D),
        params["ln1_gamma"].reshape(1, D), params["ln1_beta"].reshape(1, D),
        params["lin1_weight"].astype(bf16), params["lin1_bias"].reshape(1, dim_ff),
        params["lin2_weight"].astype(bf16), params["lin2_bias"].reshape(1, D),
        params["ln2_gamma"].reshape(1, D), params["ln2_beta"].reshape(1, D),
    )
    return jnp.transpose(out, (1, 0, 2))              # back to (S, B, D)


# ------------------------------ reference ---------------------------------- #

def reference_forward(src, src_embed, params):
    S, B, D = src.shape
    H = params["nhead"]
    hd = D // H
    scale = 1.0 / math.sqrt(hd)

    pos = src + src_embed
    wq, wk, wv = jnp.split(params["in_proj_weight"], 3, axis=0)
    bq, bk, bv = jnp.split(params["in_proj_bias"], 3, axis=0)
    q = pos.reshape(S * B, D) @ wq.T + bq
    k = pos.reshape(S * B, D) @ wk.T + bk
    v = src.reshape(S * B, D) @ wv.T + bv

    def split_heads(t):
        return t.reshape(S, B * H, hd).transpose(1, 0, 2)

    qh, kh, vh = split_heads(q), split_heads(k), split_heads(v)
    s = jnp.einsum("bqd,bkd->bqk", qh, kh) * scale
    p = jax.nn.softmax(s, axis=-1)
    attn = jnp.einsum("bqk,bkd->bqd", p, vh).transpose(1, 0, 2).reshape(S * B, D)
    attn = attn @ params["out_proj_weight"].T + params["out_proj_bias"]

    def ln(x, g, b, eps=1e-5):
        m = jnp.mean(x, axis=-1, keepdims=True)
        var = jnp.mean((x - m) ** 2, axis=-1, keepdims=True)
        return (x - m) * jax.lax.rsqrt(var + eps) * g + b

    h1 = ln(src.reshape(S * B, D) + attn, params["ln1_gamma"], params["ln1_beta"])
    ff = jnp.maximum(h1 @ params["lin1_weight"].T + params["lin1_bias"], 0.0)
    ff = ff @ params["lin2_weight"].T + params["lin2_bias"]
    out = ln(h1 + ff, params["ln2_gamma"], params["ln2_beta"])
    return out.reshape(S, B, D)


# -------------------------------- main ------------------------------------- #

if __name__ == "__main__":
    S, B = 8, 2
    d_model, nhead, dim_ff = 32, 4, 64

    key = jax.random.PRNGKey(0)
    keys = jax.random.split(key, 10)

    params = {
        "nhead": nhead,
        "in_proj_weight": 0.05 * jax.random.normal(keys[0], (3 * d_model, d_model), jnp.float32),
        "in_proj_bias": 0.05 * jax.random.normal(keys[1], (3 * d_model,), jnp.float32),
        "out_proj_weight": 0.05 * jax.random.normal(keys[2], (d_model, d_model), jnp.float32),
        "out_proj_bias": 0.05 * jax.random.normal(keys[3], (d_model,), jnp.float32),
        "lin1_weight": 0.05 * jax.random.normal(keys[4], (dim_ff, d_model), jnp.float32),
        "lin1_bias": 0.05 * jax.random.normal(keys[5], (dim_ff,), jnp.float32),
        "lin2_weight": 0.05 * jax.random.normal(keys[6], (d_model, dim_ff), jnp.float32),
        "lin2_bias": 0.05 * jax.random.normal(keys[7], (d_model,), jnp.float32),
        "ln1_gamma": jnp.ones((d_model,), jnp.float32),
        "ln1_beta": jnp.zeros((d_model,), jnp.float32),
        "ln2_gamma": jnp.ones((d_model,), jnp.float32),
        "ln2_beta": jnp.zeros((d_model,), jnp.float32),
    }

    src = jax.random.normal(keys[8], (S, B, d_model), jnp.float32)
    src_embed = jax.random.normal(keys[9], (S, B, d_model), jnp.float32)

    out = transformer_encoder_layer(src, src_embed, params)
    out = jax.block_until_ready(out)

    ref = reference_forward(src, src_embed, params)
    assert out.shape == (S, B, d_model)
    # Tolerance relaxed vs. the pure-f32 version: matmuls now use bf16 MXU
    # operands (f32 accumulation), which is the intended production precision.
    err = float(jnp.max(jnp.abs(out - ref)))
    assert jnp.allclose(out, ref, atol=2e-2, rtol=2e-2), f"mismatch vs reference (max abs err {err})"

    print("KERNEL_OK")
</pallas_src>

<mosaic_0001>
module attributes {stable_mosaic.version = 11 : i64} {
  func.func @_encoder_layer_kernel(%arg0: i32, %arg1: memref<1x8x32xf32, #tpu.memory_space<vmem>>, %arg2: memref<1x8x32xf32, #tpu.memory_space<vmem>>, %arg3: memref<64x32xbf16, #tpu.memory_space<vmem>>, %arg4: memref<64x1xf32, #tpu.memory_space<vmem>>, %arg5: memref<32x32xbf16, #tpu.memory_space<vmem>>, %arg6: memref<32x1xf32, #tpu.memory_space<vmem>>, %arg7: memref<32x32xbf16, #tpu.memory_space<vmem>>, %arg8: memref<1x32xf32, #tpu.memory_space<vmem>>, %arg9: memref<1x32xf32, #tpu.memory_space<vmem>>, %arg10: memref<1x32xf32, #tpu.memory_space<vmem>>, %arg11: memref<64x32xbf16, #tpu.memory_space<vmem>>, %arg12: memref<1x64xf32, #tpu.memory_space<vmem>>, %arg13: memref<32x64xbf16, #tpu.memory_space<vmem>>, %arg14: memref<1x32xf32, #tpu.memory_space<vmem>>, %arg15: memref<1x32xf32, #tpu.memory_space<vmem>>, %arg16: memref<1x32xf32, #tpu.memory_space<vmem>>, %arg17: memref<1x8x32xf32, #tpu.memory_space<vmem>>) attributes {dimension_semantics = [#tpu.dimension_semantics<parallel>], iteration_bounds = array<i64: 2>, scalar_prefetch = 0 : i64, scratch_operands = 0 : i64, tpu.core_type = #tpu.core_type<tc>, window_params = [{transform_indices = @transform_0, window_bounds = array<i64: 1, 8, 32>}, {transform_indices = @transform_1, window_bounds = array<i64: 1, 8, 32>}, {pipeline_mode = #tpu.pipeline_mode<synchronous>, transform_indices = @transform_2, window_bounds = array<i64: 64, 32>}, {pipeline_mode = #tpu.pipeline_mode<synchronous>, transform_indices = @transform_3, window_bounds = array<i64: 64, 1>}, {pipeline_mode = #tpu.pipeline_mode<synchronous>, transform_indices = @transform_4, window_bounds = array<i64: 32, 32>}, {pipeline_mode = #tpu.pipeline_mode<synchronous>, transform_indices = @transform_5, window_bounds = array<i64: 32, 1>}, {pipeline_mode = #tpu.pipeline_mode<synchronous>, transform_indices = @transform_6, window_bounds = array<i64: 32, 32>}, {pipeline_mode = #tpu.pipeline_mode<synchronous>, transform_indices = @transform_7, window_bounds = array<i64: 1, 32>}, {pipeline_mode = #tpu.pipeline_mode<synchronous>, transform_indices = @transform_8, window_bounds = array<i64: 1, 32>}, {pipeline_mode = #tpu.pipeline_mode<synchronous>, transform_indices = @transform_9, window_bounds = array<i64: 1, 32>}, {pipeline_mode = #tpu.pipeline_mode<synchronous>, transform_indices = @transform_10, window_bounds = array<i64: 64, 32>}, {pipeline_mode = #tpu.pipeline_mode<synchronous>, transform_indices = @transform_11, window_bounds = array<i64: 1, 64>}, {pipeline_mode = #tpu.pipeline_mode<synchronous>, transform_indices = @transform_12, window_bounds = array<i64: 32, 64>}, {pipeline_mode = #tpu.pipeline_mode<synchronous>, transform_indices = @transform_13, window_bounds = array<i64: 1, 32>}, {pipeline_mode = #tpu.pipeline_mode<synchronous>, transform_indices = @transform_14, window_bounds = array<i64: 1, 32>}, {pipeline_mode = #tpu.pipeline_mode<synchronous>, transform_indices = @transform_15, window_bounds = array<i64: 1, 32>}, {transform_indices = @transform_16, window_bounds = array<i64: 1, 8, 32>}]} {
    %c0 = arith.constant 0 : index
    %c0_0 = arith.constant 0 : index
    %c0_1 = arith.constant 0 : index
    %0 = vector.load %arg1[%c0, %c0_0, %c0_1] : memref<1x8x32xf32, #tpu.memory_space<vmem>>, vector<1x8x32xf32>
    %1 = vector.shape_cast %0 : vector<1x8x32xf32> to vector<8x32xf32>
    %c0_2 = arith.constant 0 : index
    %c0_3 = arith.constant 0 : index
    %c0_4 = arith.constant 0 : index
    %2 = vector.load %arg2[%c0_2, %c0_3, %c0_4] : memref<1x8x32xf32, #tpu.memory_space<vmem>>, vector<1x8x32xf32>
    %3 = vector.shape_cast %2 : vector<1x8x32xf32> to vector<8x32xf32>
    %4 = arith.addf %1, %3 : vector<8x32xf32>
    %5 = arith.truncf %4 : vector<8x32xf32> to vector<8x32xbf16>
    %6 = arith.truncf %1 : vector<8x32xf32> to vector<8x32xbf16>
    %c0_5 = arith.constant 0 : index
    %c0_6 = arith.constant 0 : index
    %7 = vector.load %arg3[%c0_5, %c0_6] : memref<64x32xbf16, #tpu.memory_space<vmem>>, vector<64x32xbf16>
    %cst = arith.constant dense<0.000000e+00> : vector<64x8xf32>
    %8 = tpu.matmul %7, %5, %cst {dimension_numbers = #tpu.dot_dimension_numbers<[1], [1], [0], [0], [0, 0, 1, 0], [], []>} : vector<64x32xbf16>, vector<8x32xbf16>, vector<64x8xf32> -> vector<64x8xf32>
    %c0_7 = arith.constant 0 : index
    %c0_8 = arith.constant 0 : index
    %9 = vector.load %arg4[%c0_7, %c0_8] : memref<64x1xf32, #tpu.memory_space<vmem>>, vector<64x1xf32>
    %10 = vector.broadcast %9 : vector<64x1xf32> to vector<64x8xf32>
    %11 = arith.addf %8, %10 : vector<64x8xf32>
    %c0_9 = arith.constant 0 : index
    %c0_10 = arith.constant 0 : index
    %12 = vector.load %arg5[%c0_9, %c0_10] : memref<32x32xbf16, #tpu.memory_space<vmem>>, vector<32x32xbf16>
    %cst_11 = arith.constant dense<0.000000e+00> : vector<32x8xf32>
    %13 = tpu.matmul %12, %6, %cst_11 {dimension_numbers = #tpu.dot_dimension_numbers<[1], [1], [0], [0], [0, 0, 1, 0], [], []>} : vector<32x32xbf16>, vector<8x32xbf16>, vector<32x8xf32> -> vector<32x8xf32>
    %c0_12 = arith.constant 0 : index
    %c0_13 = arith.constant 0 : index
    %14 = vector.load %arg6[%c0_12, %c0_13] : memref<32x1xf32, #tpu.memory_space<vmem>>, vector<32x1xf32>
    %15 = vector.broadcast %14 : vector<32x1xf32> to vector<32x8xf32>
    %16 = arith.addf %13, %15 : vector<32x8xf32>
    %17 = vector.shape_cast %11 : vector<64x8xf32> to vector<8x8x8xf32>
    %18 = vector.extract_strided_slice %17 {offsets = [0, 0, 0], sizes = [4, 8, 8], strides = [1, 1, 1]} : vector<8x8x8xf32> to vector<4x8x8xf32>
    %19 = arith.truncf %18 : vector<4x8x8xf32> to vector<4x8x8xbf16>
    %20 = vector.extract_strided_slice %17 {offsets = [4, 0, 0], sizes = [4, 8, 8], strides = [1, 1, 1]} : vector<8x8x8xf32> to vector<4x8x8xf32>
    %21 = arith.truncf %20 : vector<4x8x8xf32> to vector<4x8x8xbf16>
    %22 = vector.shape_cast %16 : vector<32x8xf32> to vector<4x8x8xf32>
    %23 = arith.truncf %22 : vector<4x8x8xf32> to vector<4x8x8xbf16>
    %cst_14 = arith.constant dense<0.000000e+00> : vector<4x8x8xf32>
    %24 = tpu.matmul %19, %21, %cst_14 {dimension_numbers = #tpu.dot_dimension_numbers<[1], [1], [2], [2], [0, 0, 0, 2, 1, 2], [0], [0]>} : vector<4x8x8xbf16>, vector<4x8x8xbf16>, vector<4x8x8xf32> -> vector<4x8x8xf32>
    %cst_15 = arith.constant 0.353553385 : f32
    %25 = vector.broadcast %cst_15 : f32 to vector<4x8x8xf32>
    %26 = arith.mulf %24, %25 : vector<4x8x8xf32>
    %cst_16 = arith.constant dense<0xFF800000> : vector<4x8xf32>
    %27 = vector.multi_reduction <maximumf>, %26, %cst_16 [2] : vector<4x8x8xf32> to vector<4x8xf32>
    %28 = vector.shape_cast %27 : vector<4x8xf32> to vector<4x8x1xf32>
    %29 = vector.broadcast %28 : vector<4x8x1xf32> to vector<4x8x8xf32>
    %30 = arith.subf %26, %29 : vector<4x8x8xf32>
    %31 = math.exp %30 : vector<4x8x8xf32>
    %cst_17 = arith.constant dense<0.000000e+00> : vector<4x8xf32>
    %32 = vector.multi_reduction <add>, %31, %cst_17 [2] : vector<4x8x8xf32> to vector<4x8xf32>
    %33 = vector.shape_cast %32 : vector<4x8xf32> to vector<4x8x1xf32>
    %34 = vector.broadcast %33 : vector<4x8x1xf32> to vector<4x8x8xf32>
    %35 = arith.divf %31, %34 : vector<4x8x8xf32>
    %36 = arith.truncf %35 : vector<4x8x8xf32> to vector<4x8x8xbf16>
    %cst_18 = arith.constant dense<0.000000e+00> : vector<4x8x8xf32>
    %37 = tpu.matmul %23, %36, %cst_18 {dimension_numbers = #tpu.dot_dimension_numbers<[2], [2], [1], [1], [0, 0, 0, 1, 1, 1], [0], [0]>} : vector<4x8x8xbf16>, vector<4x8x8xbf16>, vector<4x8x8xf32> -> vector<4x8x8xf32>
    %38 = vector.shape_cast %37 : vector<4x8x8xf32> to vector<32x8xf32>
    %39 = arith.truncf %38 : vector<32x8xf32> to vector<32x8xbf16>
    %c0_19 = arith.constant 0 : index
    %c0_20 = arith.constant 0 : index
    %40 = vector.load %arg7[%c0_19, %c0_20] : memref<32x32xbf16, #tpu.memory_space<vmem>>, vector<32x32xbf16>
    %cst_21 = arith.constant dense<0.000000e+00> : vector<8x32xf32>
    %41 = tpu.matmul %39, %40, %cst_21 {dimension_numbers = #tpu.dot_dimension_numbers<[0], [1], [1], [0], [0, 1, 1, 0], [], []>} : vector<32x8xbf16>, vector<32x32xbf16>, vector<8x32xf32> -> vector<8x32xf32>
    %c0_22 = arith.constant 0 : index
    %c0_23 = arith.constant 0 : index
    %42 = vector.load %arg8[%c0_22, %c0_23] : memref<1x32xf32, #tpu.memory_space<vmem>>, vector<1x32xf32>
    %43 = vector.broadcast %42 : vector<1x32xf32> to vector<8x32xf32>
    %44 = arith.addf %41, %43 : vector<8x32xf32>
    %45 = arith.addf %1, %44 : vector<8x32xf32>
    %c0_24 = arith.constant 0 : index
    %c0_25 = arith.constant 0 : index
    %46 = vector.load %arg9[%c0_24, %c0_25] : memref<1x32xf32, #tpu.memory_space<vmem>>, vector<1x32xf32>
    %c0_26 = arith.constant 0 : index
    %c0_27 = arith.constant 0 : index
    %47 = vector.load %arg10[%c0_26, %c0_27] : memref<1x32xf32, #tpu.memory_space<vmem>>, vector<1x32xf32>
    %cst_28 = arith.constant dense<0.000000e+00> : vector<8xf32>
    %48 = vector.multi_reduction <add>, %45, %cst_28 [1] : vector<8x32xf32> to vector<8xf32>
    %49 = vector.shape_cast %48 : vector<8xf32> to vector<8x1xf32>
    %50 = arith.mulf %45, %45 : vector<8x32xf32>
    %cst_29 = arith.constant dense<0.000000e+00> : vector<8xf32>
    %51 = vector.multi_reduction <add>, %50, %cst_29 [1] : vector<8x32xf32> to vector<8xf32>
    %52 = vector.shape_cast %51 : vector<8xf32> to vector<8x1xf32>
    %cst_30 = arith.constant 3.200000e+01 : f32
    %53 = vector.broadcast %cst_30 : f32 to vector<8x1xf32>
    %54 = arith.divf %49, %53 : vector<8x1xf32>
    %cst_31 = arith.constant 3.200000e+01 : f32
    %55 = vector.broadcast %cst_31 : f32 to vector<8x1xf32>
    %56 = arith.divf %52, %55 : vector<8x1xf32>
    %57 = arith.mulf %54, %54 : vector<8x1xf32>
    %58 = arith.subf %56, %57 : vector<8x1xf32>
    %59 = vector.broadcast %54 : vector<8x1xf32> to vector<8x32xf32>
    %60 = arith.subf %45, %59 : vector<8x32xf32>
    %cst_32 = arith.constant 9.99999974E-6 : f32
    %61 = vector.broadcast %cst_32 : f32 to vector<8x1xf32>
    %62 = arith.addf %58, %61 : vector<8x1xf32>
    %63 = math.rsqrt %62 : vector<8x1xf32>
    %64 = vector.broadcast %63 : vector<8x1xf32> to vector<8x32xf32>
    %65 = arith.mulf %60, %64 : vector<8x32xf32>
    %66 = vector.broadcast %46 : vector<1x32xf32> to vector<8x32xf32>
    %67 = arith.mulf %65, %66 : vector<8x32xf32>
    %68 = vector.broadcast %47 : vector<1x32xf32> to vector<8x32xf32>
    %69 = arith.addf %67, %68 : vector<8x32xf32>
    %70 = arith.truncf %69 : vector<8x32xf32> to vector<8x32xbf16>
    %c0_33 = arith.constant 0 : index
    %c0_34 = arith.constant 0 : index
    %71 = vector.load %arg11[%c0_33, %c0_34] : memref<64x32xbf16, #tpu.memory_space<vmem>>, vector<64x32xbf16>
    %cst_35 = arith.constant dense<0.000000e+00> : vector<8x64xf32>
    %72 = tpu.matmul %70, %71, %cst_35 {dimension_numbers = #tpu.dot_dimension_numbers<[1], [1], [0], [0], [0, 0, 1, 0], [], []>} : vector<8x32xbf16>, vector<64x32xbf16>, vector<8x64xf32> -> vector<8x64xf32>
    %c0_36 = arith.constant 0 : index
    %c0_37 = arith.constant 0 : index
    %73 = vector.load %arg12[%c0_36, %c0_37] : memref<1x64xf32, #tpu.memory_space<vmem>>, vector<1x64xf32>
    %74 = vector.broadcast %73 : vector<1x64xf32> to vector<8x64xf32>
    %75 = arith.addf %72, %74 : vector<8x64xf32>
    %cst_38 = arith.constant 0.000000e+00 : f32
    %76 = vector.broadcast %cst_38 : f32 to vector<8x64xf32>
    %77 = arith.maximumf %75, %76 : vector<8x64xf32>
    %78 = arith.truncf %77 : vector<8x64xf32> to vector<8x64xbf16>
    %c0_39 = arith.constant 0 : index
    %c0_40 = arith.constant 0 : index
    %79 = vector.load %arg13[%c0_39, %c0_40] : memref<32x64xbf16, #tpu.memory_space<vmem>>, vector<32x64xbf16>
    %cst_41 = arith.constant dense<0.000000e+00> : vector<8x32xf32>
    %80 = tpu.matmul %78, %79, %cst_41 {dimension_numbers = #tpu.dot_dimension_numbers<[1], [1], [0], [0], [0, 0, 1, 0], [], []>} : vector<8x64xbf16>, vector<32x64xbf16>, vector<8x32xf32> -> vector<8x32xf32>
    %c0_42 = arith.constant 0 : index
    %c0_43 = arith.constant 0 : index
    %81 = vector.load %arg14[%c0_42, %c0_43] : memref<1x32xf32, #tpu.memory_space<vmem>>, vector<1x32xf32>
    %82 = vector.broadcast %81 : vector<1x32xf32> to vector<8x32xf32>
    %83 = arith.addf %80, %82 : vector<8x32xf32>
    %84 = arith.addf %69, %83 : vector<8x32xf32>
    %c0_44 = arith.constant 0 : index
    %c0_45 = arith.constant 0 : index
    %85 = vector.load %arg15[%c0_44, %c0_45] : memref<1x32xf32, #tpu.memory_space<vmem>>, vector<1x32xf32>
    %c0_46 = arith.constant 0 : index
    %c0_47 = arith.constant 0 : index
    %86 = vector.load %arg16[%c0_46, %c0_47] : memref<1x32xf32, #tpu.memory_space<vmem>>, vector<1x32xf32>
    %cst_48 = arith.constant dense<0.000000e+00> : vector<8xf32>
    %87 = vector.multi_reduction <add>, %84, %cst_48 [1] : vector<8x32xf32> to vector<8xf32>
    %88 = vector.shape_cast %87 : vector<8xf32> to vector<8x1xf32>
    %89 = arith.mulf %84, %84 : vector<8x32xf32>
    %cst_49 = arith.constant dense<0.000000e+00> : vector<8xf32>
    %90 = vector.multi_reduction <add>, %89, %cst_49 [1] : vector<8x32xf32> to vector<8xf32>
    %91 = vector.shape_cast %90 : vector<8xf32> to vector<8x1xf32>
    %cst_50 = arith.constant 3.200000e+01 : f32
    %92 = vector.broadcast %cst_50 : f32 to vector<8x1xf32>
    %93 = arith.divf %88, %92 : vector<8x1xf32>
    %cst_51 = arith.constant 3.200000e+01 : f32
    %94 = vector.broadcast %cst_51 : f32 to vector<8x1xf32>
    %95 = arith.divf %91, %94 : vector<8x1xf32>
    %96 = arith.mulf %93, %93 : vector<8x1xf32>
    %97 = arith.subf %95, %96 : vector<8x1xf32>
    %98 = vector.broadcast %93 : vector<8x1xf32> to vector<8x32xf32>
    %99 = arith.subf %84, %98 : vector<8x32xf32>
    %cst_52 = arith.constant 9.99999974E-6 : f32
    %100 = vector.broadcast %cst_52 : f32 to vector<8x1xf32>
    %101 = arith.addf %97, %100 : vector<8x1xf32>
    %102 = math.rsqrt %101 : vector<8x1xf32>
    %103 = vector.broadcast %102 : vector<8x1xf32> to vector<8x32xf32>
    %104 = arith.mulf %99, %103 : vector<8x32xf32>
    %105 = vector.broadcast %85 : vector<1x32xf32> to vector<8x32xf32>
    %106 = arith.mulf %104, %105 : vector<8x32xf32>
    %107 = vector.broadcast %86 : vector<1x32xf32> to vector<8x32xf32>
    %108 = arith.addf %106, %107 : vector<8x32xf32>
    %c0_53 = arith.constant 0 : index
    %c0_54 = arith.constant 0 : index
    %c0_55 = arith.constant 0 : index
    %109 = vector.load %arg17[%c0_53, %c0_54, %c0_55] : memref<1x8x32xf32, #tpu.memory_space<vmem>>, vector<1x8x32xf32>
    %110 = vector.shape_cast %109 : vector<1x8x32xf32> to vector<8x32xf32>
    %111 = vector.shape_cast %108 : vector<8x32xf32> to vector<1x8x32xf32>
    tpu.vector_store %arg17[%c0_53, %c0_54, %c0_55], %111 {strides = array<i32>} : memref<1x8x32xf32, #tpu.memory_space<vmem>>, vector<1x8x32xf32>,
    return
  }
  func.func @transform_0(%arg0: i32) -> (i32, i32, i32) {
    %c0_i32 = arith.constant 0 : i32
    %c0_i32_0 = arith.constant 0 : i32
    %c0_i32_1 = arith.constant 0 : i32
    return %arg0, %c0_i32, %c0_i32_0 : i32, i32, i32
  }
  func.func @transform_1(%arg0: i32) -> (i32, i32, i32) {
    %c0_i32 = arith.constant 0 : i32
    %c0_i32_0 = arith.constant 0 : i32
    %c0_i32_1 = arith.constant 0 : i32
    return %arg0, %c0_i32, %c0_i32_0 : i32, i32, i32
  }
  func.func @transform_2(%arg0: i32) -> (i32, i32) {
    %c0_i32 = arith.constant 0 : i32
    %c0_i32_0 = arith.constant 0 : i32
    %c0_i32_1 = arith.constant 0 : i32
    return %c0_i32, %c0_i32_0 : i32, i32
  }
  func.func @transform_3(%arg0: i32) -> (i32, i32) {
    %c0_i32 = arith.constant 0 : i32
    %c0_i32_0 = arith.constant 0 : i32
    %c0_i32_1 = arith.constant 0 : i32
    return %c0_i32, %c0_i32_0 : i32, i32
  }
  func.func @transform_4(%arg0: i32) -> (i32, i32) {
    %c0_i32 = arith.constant 0 : i32
    %c0_i32_0 = arith.constant 0 : i32
    %c0_i32_1 = arith.constant 0 : i32
    return %c0_i32, %c0_i32_0 : i32, i32
  }
  func.func @transform_5(%arg0: i32) -> (i32, i32) {
    %c0_i32 = arith.constant 0 : i32
    %c0_i32_0 = arith.constant 0 : i32
    %c0_i32_1 = arith.constant 0 : i32
    return %c0_i32, %c0_i32_0 : i32, i32
  }
  func.func @transform_6(%arg0: i32) -> (i32, i32) {
    %c0_i32 = arith.constant 0 : i32
    %c0_i32_0 = arith.constant 0 : i32
    %c0_i32_1 = arith.constant 0 : i32
    return %c0_i32, %c0_i32_0 : i32, i32
  }
  func.func @transform_7(%arg0: i32) -> (i32, i32) {
    %c0_i32 = arith.constant 0 : i32
    %c0_i32_0 = arith.constant 0 : i32
    %c0_i32_1 = arith.constant 0 : i32
    return %c0_i32, %c0_i32_0 : i32, i32
  }
  func.func @transform_8(%arg0: i32) -> (i32, i32) {
    %c0_i32 = arith.constant 0 : i32
    %c0_i32_0 = arith.constant 0 : i32
    %c0_i32_1 = arith.constant 0 : i32
    return %c0_i32, %c0_i32_0 : i32, i32
  }
  func.func @transform_9(%arg0: i32) -> (i32, i32) {
    %c0_i32 = arith.constant 0 : i32
    %c0_i32_0 = arith.constant 0 : i32
    %c0_i32_1 = arith.constant 0 : i32
    return %c0_i32, %c0_i32_0 : i32, i32
  }
  func.func @transform_10(%arg0: i32) -> (i32, i32) {
    %c0_i32 = arith.constant 0 : i32
    %c0_i32_0 = arith.constant 0 : i32
    %c0_i32_1 = arith.constant 0 : i32
    return %c0_i32, %c0_i32_0 : i32, i32
  }
  func.func @transform_11(%arg0: i32) -> (i32, i32) {
    %c0_i32 = arith.constant 0 : i32
    %c0_i32_0 = arith.constant 0 : i32
    %c0_i32_1 = arith.constant 0 : i32
    return %c0_i32, %c0_i32_0 : i32, i32
  }
  func.func @transform_12(%arg0: i32) -> (i32, i32) {
    %c0_i32 = arith.constant 0 : i32
    %c0_i32_0 = arith.constant 0 : i32
    %c0_i32_1 = arith.constant 0 : i32
    return %c0_i32, %c0_i32_0 : i32, i32
  }
  func.func @transform_13(%arg0: i32) -> (i32, i32) {
    %c0_i32 = arith.constant 0 : i32
    %c0_i32_0 = arith.constant 0 : i32
    %c0_i32_1 = arith.constant 0 : i32
    return %c0_i32, %c0_i32_0 : i32, i32
  }
  func.func @transform_14(%arg0: i32) -> (i32, i32) {
    %c0_i32 = arith.constant 0 : i32
    %c0_i32_0 = arith.constant 0 : i32
    %c0_i32_1 = arith.constant 0 : i32
    return %c0_i32, %c0_i32_0 : i32, i32
  }
  func.func @transform_15(%arg0: i32) -> (i32, i32) {
    %c0_i32 = arith.constant 0 : i32
    %c0_i32_0 = arith.constant 0 : i32
    %c0_i32_1 = arith.constant 0 : i32
    return %c0_i32, %c0_i32_0 : i32, i32
  }
  func.func @transform_16(%arg0: i32) -> (i32, i32, i32) {
    %c0_i32 = arith.constant 0 : i32
    %c0_i32_0 = arith.constant 0 : i32
    %c0_i32_1 = arith.constant 0 : i32
    return %arg0, %c0_i32, %c0_i32_0 : i32, i32, i32
  }
}

</mosaic_0001>

<llo_original>
// kernel: tpu_custom_call.1
$region0: #{tpu_custom_call.1}
  #allocation0 [shape = 'u32[]', space=smem, size = 0x4, offset = 0x4, fixed_abs, tag = 'smem constant byte address 0x4 - core index']
  #allocation1 [shape = 'u32[144,128]{1,0:T(1,128)}', space=vmem, size = 0x12000, scoped, tag = 'internal scratch']
  %s0 = inlined_call_operand.vmem [shape: f32[2,8,32], index: 0, kind: input, shape index: {}]
  %s1 = inlined_call_operand.vmem [shape: f32[2,8,32], index: 1, kind: input, shape index: {}]
  %s2 = inlined_call_operand.vmem [shape: bf16[64,32], index: 2, kind: input, shape index: {}]
  %s3 = inlined_call_operand.vmem [shape: f32[64,1], index: 3, kind: input, shape index: {}]
  %s4 = inlined_call_operand.vmem [shape: bf16[32,32], index: 4, kind: input, shape index: {}]
  %s5 = inlined_call_operand.vmem [shape: f32[32,1], index: 5, kind: input, shape index: {}]
  %s6 = inlined_call_operand.vmem [shape: bf16[32,32], index: 6, kind: input, shape index: {}]
  %s7 = inlined_call_operand.vmem [shape: f32[1,32], index: 7, kind: input, shape index: {}]
  %s8 = inlined_call_operand.vmem [shape: f32[1,32], index: 8, kind: input, shape index: {}]
  %s9 = inlined_call_operand.vmem [shape: f32[1,32], index: 9, kind: input, shape index: {}]
  %s10 = inlined_call_operand.vmem [shape: bf16[64,32], index: 10, kind: input, shape index: {}]
  %s11 = inlined_call_operand.vmem [shape: f32[1,64], index: 11, kind: input, shape index: {}]
  %s12 = inlined_call_operand.vmem [shape: bf16[32,64], index: 12, kind: input, shape index: {}]
  %s13 = inlined_call_operand.vmem [shape: f32[1,32], index: 13, kind: input, shape index: {}]
  %s14 = inlined_call_operand.vmem [shape: f32[1,32], index: 14, kind: input, shape index: {}]
  %s15 = inlined_call_operand.vmem [shape: f32[1,32], index: 15, kind: input, shape index: {}]
  %s16 = inlined_call_operand.hbm [shape: f32[2,8,32], index: 16, kind: output, shape index: {}]
  %s17 = sld [smem:[#allocation0]]
  $region97: #{tpu_custom_call.1} parent=0
    _
  %s19 = ssub.s32 1, %s17
  %s20 = scalar_select 0, %s19, %s17
  $region1: #{tpu_custom_call.1} parent=0
    #allocation2 [shape = 'u8[8192]{0}', space=vmem, size = 0x2000, scoped, tag = 'output window, operand 0']
    #allocation3 [shape = 's32[2]{0}', space=sflag, size = 0x8, scoped, tag = 'scoped memory for tpu_custom_call.1']
    %21 = vsyncpa [#allocation3], 0
    %s22 = scalar_lea.sflag [#allocation3], 1
    %23 = vsyncpa %s22, 0
    loop: start=0, step=1, limit=4
    $region2: #{tpu_custom_call.1} parent=1 // loop_pre_header
      _
    $region3: #{tpu_custom_call.1} parent=1 // loop_header
      %s25 = sphi 0, %s29
      %p26 = scmp.ge.s32.totalorder %s25, 4
      %s35 = sphi 0, %s37
      %s38 = sphi 0, %s35
      %s39 = sphi 0, %s38
      %s55 = sphi 0, %s39
      %s61 = sphi 0, %s63
      %s64 = sphi 0, %s61
      %s65 = sphi 0, %s64
      %s81 = sphi 0, %s65
      %s85 = sphi 0, %s85
      %s87 = sphi 0, %s85
      %s88 = sphi 0, %s87
      %s102 = sphi 0, %s88
      %s106 = sphi 0, %s106
      %s108 = sphi 0, %s106
      %s109 = sphi 0, %s108
      %s123 = sphi 0, %s109
      %s127 = sphi 0, %s127
      %s129 = sphi 0, %s127
      %s130 = sphi 0, %s129
      %s144 = sphi 0, %s130
      %s148 = sphi 0, %s148
      %s150 = sphi 0, %s148
      %s151 = sphi 0, %s150
      %s165 = sphi 0, %s151
      %s169 = sphi 0, %s169
      %s171 = sphi 0, %s169
      %s172 = sphi 0, %s171
      %s186 = sphi 0, %s172
      %s190 = sphi 0, %s190
      %s192 = sphi 0, %s190
      %s193 = sphi 0, %s192
      %s207 = sphi 0, %s193
      %s211 = sphi 0, %s211
      %s213 = sphi 0, %s211
      %s214 = sphi 0, %s213
      %s228 = sphi 0, %s214
      %s232 = sphi 0, %s232
      %s234 = sphi 0, %s232
      %s235 = sphi 0, %s234
      %s249 = sphi 0, %s235
      %s253 = sphi 0, %s253
      %s255 = sphi 0, %s253
      %s256 = sphi 0, %s255
      %s270 = sphi 0, %s256
      %s274 = sphi 0, %s274
      %s276 = sphi 0, %s274
      %s277 = sphi 0, %s276
      %s291 = sphi 0, %s277
      %s295 = sphi 0, %s295
      %s297 = sphi 0, %s295
      %s298 = sphi 0, %s297
      %s312 = sphi 0, %s298
      %s316 = sphi 0, %s316
      %s318 = sphi 0, %s316
      %s319 = sphi 0, %s318
      %s333 = sphi 0, %s319
      %s337 = sphi 0, %s337
      %s339 = sphi 0, %s337
      %s340 = sphi 0, %s339
      %s354 = sphi 0, %s340
      %s358 = sphi 0, %s358
      %s360 = sphi 0, %s358
      %s361 = sphi 0, %s360
      %s375 = sphi 0, %s361
      %s381 = sphi 0, %s383
      %s384 = sphi 0, %s381
      %s385 = sphi 0, %s384
      %s401 = sphi 0, %s385
    $region4: #{tpu_custom_call.1} parent=1 // loop_header_branch
      %28 = sbr.rel (%p26) target = $region8
    $region5: #{tpu_custom_call.1} parent=1 // loop_body
      %s30 = ssub.s32 %s25, 1
      %s31 = ssub.s32 %s25, 2
      %s32 = sadd.s32 %s25, 1
      %s33 = ssub.s32 %s25, %s32
      %p34 = scmp.eq.s32.totalorder %s33, 0
      %s36 = sadd.s32 %s35, 1
      %s37 = scalar_select %p34, %s35, %s36
      %p40 = pneg %p34
      %p41 = scmp.eq.s32.totalorder %s25, 1
      %p42 = por %p40, %p41
      %p43 = scmp.ne.s32.totalorder %s35, %s38
      %p44 = scmp.eq.s32.totalorder %s25, 0
      %p45 = por %p43, %p44
      %p46 = scmp.ne.s32.totalorder %s35, %s38
      %p47 = scmp.eq.s32.totalorder %s30, 1
      %p48 = por %p46, %p47
      %p49 = scmp.ne.s32.totalorder %s38, %s39
      %p50 = scmp.eq.s32.totalorder %s30, 0
      %p51 = por %p49, %p50
      %p52 = scmp.ne.s32.totalorder %s38, %s39
      %p53 = scmp.eq.s32.totalorder %s31, 1
      %p54 = por %p52, %p53
      %p56 = scmp.ne.s32.totalorder %s39, %s55
      %p57 = scmp.eq.s32.totalorder %s31, 0
      %p58 = por %p56, %p57
      %s59 = ssub.s32 %s25, %s32
      %p60 = scmp.eq.s32.totalorder %s59, 0
      %s62 = sadd.s32 %s61, 1
      %s63 = scalar_select %p60, %s61, %s62
      %p66 = pneg %p60
      %p67 = scmp.eq.s32.totalorder %s25, 1
      %p68 = por %p66, %p67
      %p69 = scmp.ne.s32.totalorder %s61, %s64
      %p70 = scmp.eq.s32.totalorder %s25, 0
      %p71 = por %p69, %p70
      %p72 = scmp.ne.s32.totalorder %s61, %s64
      %p73 = scmp.eq.s32.totalorder %s30, 1
      %p74 = por %p72, %p73
      %p75 = scmp.ne.s32.totalorder %s64, %s65
      %p76 = scmp.eq.s32.totalorder %s30, 0
      %p77 = por %p75, %p76
      %p78 = scmp.ne.s32.totalorder %s64, %s65
      %p79 = scmp.eq.s32.totalorder %s31, 1
      %p80 = por %p78, %p79
      %p82 = scmp.ne.s32.totalorder %s65, %s81
      %p83 = scmp.eq.s32.totalorder %s31, 0
      %p84 = por %p82, %p83
      %s86 = sadd.s32 %s85, 1
      %p89 = scmp.eq.s32.totalorder %s25, 1
      %p90 = scmp.ne.s32.totalorder %s85, %s87
      %p91 = scmp.eq.s32.totalorder %s25, 0
      %p92 = por %p90, %p91
      %p93 = scmp.ne.s32.totalorder %s85, %s87
      %p94 = scmp.eq.s32.totalorder %s30, 1
      %p95 = por %p93, %p94
      %p96 = scmp.ne.s32.totalorder %s87, %s88
      %p97 = scmp.eq.s32.totalorder %s30, 0
      %p98 = por %p96, %p97
      %p99 = scmp.ne.s32.totalorder %s87, %s88
      %p100 = scmp.eq.s32.totalorder %s31, 1
      %p101 = por %p99, %p100
      %p103 = scmp.ne.s32.totalorder %s88, %s102
      %p104 = scmp.eq.s32.totalorder %s31, 0
      %p105 = por %p103, %p104
      %s107 = sadd.s32 %s106, 1
      %p110 = scmp.eq.s32.totalorder %s25, 1
      %p111 = scmp.ne.s32.totalorder %s106, %s108
      %p112 = scmp.eq.s32.totalorder %s25, 0
      %p113 = por %p111, %p112
      %p114 = scmp.ne.s32.totalorder %s106, %s108
      %p115 = scmp.eq.s32.totalorder %s30, 1
      %p116 = por %p114, %p115
      %p117 = scmp.ne.s32.totalorder %s108, %s109
      %p118 = scmp.eq.s32.totalorder %s30, 0
      %p119 = por %p117, %p118
      %p120 = scmp.ne.s32.totalorder %s108, %s109
      %p121 = scmp.eq.s32.totalorder %s31, 1
      %p122 = por %p120, %p121
      %p124 = scmp.ne.s32.totalorder %s109, %s123
      %p125 = scmp.eq.s32.totalorder %s31, 0
      %p126 = por %p124, %p125
      %s128 = sadd.s32 %s127, 1
      %p131 = scmp.eq.s32.totalorder %s25, 1
      %p132 = scmp.ne.s32.totalorder %s127, %s129
      %p133 = scmp.eq.s32.totalorder %s25, 0
      %p134 = por %p132, %p133
      %p135 = scmp.ne.s32.totalorder %s127, %s129
      %p136 = scmp.eq.s32.totalorder %s30, 1
      %p137 = por %p135, %p136
      %p138 = scmp.ne.s32.totalorder %s129, %s130
      %p139 = scmp.eq.s32.totalorder %s30, 0
      %p140 = por %p138, %p139
      %p141 = scmp.ne.s32.totalorder %s129, %s130
      %p142 = scmp.eq.s32.totalorder %s31, 1
      %p143 = por %p141, %p142
      %p145 = scmp.ne.s32.totalorder %s130, %s144
      %p146 = scmp.eq.s32.totalorder %s31, 0
      %p147 = por %p145, %p146
      %s149 = sadd.s32 %s148, 1
      %p152 = scmp.eq.s32.totalorder %s25, 1
      %p153 = scmp.ne.s32.totalorder %s148, %s150
      %p154 = scmp.eq.s32.totalorder %s25, 0
      %p155 = por %p153, %p154
      %p156 = scmp.ne.s32.totalorder %s148, %s150
      %p157 = scmp.eq.s32.totalorder %s30, 1
      %p158 = por %p156, %p157
      %p159 = scmp.ne.s32.totalorder %s150, %s151
      %p160 = scmp.eq.s32.totalorder %s30, 0
      %p161 = por %p159, %p160
      %p162 = scmp.ne.s32.totalorder %s150, %s151
      %p163 = scmp.eq.s32.totalorder %s31, 1
      %p164 = por %p162, %p163
      %p166 = scmp.ne.s32.totalorder %s151, %s165
      %p167 = scmp.eq.s32.totalorder %s31, 0
      %p168 = por %p166, %p167
      %s170 = sadd.s32 %s169, 1
      %p173 = scmp.eq.s32.totalorder %s25, 1
      %p174 = scmp.ne.s32.totalorder %s169, %s171
      %p175 = scmp.eq.s32.totalorder %s25, 0
      %p176 = por %p174, %p175
      %p177 = scmp.ne.s32.totalorder %s169, %s171
      %p178 = scmp.eq.s32.totalorder %s30, 1
      %p179 = por %p177, %p178
      %p180 = scmp.ne.s32.totalorder %s171, %s172
      %p181 = scmp.eq.s32.totalorder %s30, 0
      %p182 = por %p180, %p181
      %p183 = scmp.ne.s32.totalorder %s171, %s172
      %p184 = scmp.eq.s32.totalorder %s31, 1
      %p185 = por %p183, %p184
      %p187 = scmp.ne.s32.totalorder %s172, %s186
      %p188 = scmp.eq.s32.totalorder %s31, 0
      %p189 = por %p187, %p188
      %s191 = sadd.s32 %s190, 1
      %p194 = scmp.eq.s32.totalorder %s25, 1
      %p195 = scmp.ne.s32.totalorder %s190, %s192
      %p196 = scmp.eq.s32.totalorder %s25, 0
      %p197 = por %p195, %p196
      %p198 = scmp.ne.s32.totalorder %s190, %s192
      %p199 = scmp.eq.s32.totalorder %s30, 1
      %p200 = por %p198, %p199
      %p201 = scmp.ne.s32.totalorder %s192, %s193
      %p202 = scmp.eq.s32.totalorder %s30, 0
      %p203 = por %p201, %p202
      %p204 = scmp.ne.s32.totalorder %s192, %s193
      %p205 = scmp.eq.s32.totalorder %s31, 1
      %p206 = por %p204, %p205
      %p208 = scmp.ne.s32.totalorder %s193, %s207
      %p209 = scmp.eq.s32.totalorder %s31, 0
      %p210 = por %p208, %p209
      %s212 = sadd.s32 %s211, 1
      %p215 = scmp.eq.s32.totalorder %s25, 1
      %p216 = scmp.ne.s32.totalorder %s211, %s213
      %p217 = scmp.eq.s32.totalorder %s25, 0
      %p218 = por %p216, %p217
      %p219 = scmp.ne.s32.totalorder %s211, %s213
      %p220 = scmp.eq.s32.totalorder %s30, 1
      %p221 = por %p219, %p220
      %p222 = scmp.ne.s32.totalorder %s213, %s214
      %p223 = scmp.eq.s32.totalorder %s30, 0
      %p224 = por %p222, %p223
      %p225 = scmp.ne.s32.totalorder %s213, %s214
      %p226 = scmp.eq.s32.totalorder %s31, 1
      %p227 = por %p225, %p226
      %p229 = scmp.ne.s32.totalorder %s214, %s228
      %p230 = scmp.eq.s32.totalorder %s31, 0
      %p231 = por %p229, %p230
      %s233 = sadd.s32 %s232, 1
      %p236 = scmp.eq.s32.totalorder %s25, 1
      %p237 = scmp.ne.s32.totalorder %s232, %s234
      %p238 = scmp.eq.s32.totalorder %s25, 0
      %p239 = por %p237, %p238
      %p240 = scmp.ne.s32.totalorder %s232, %s234
      %p241 = scmp.eq.s32.totalorder %s30, 1
      %p242 = por %p240, %p241
      %p243 = scmp.ne.s32.totalorder %s234, %s235
      %p244 = scmp.eq.s32.totalorder %s30, 0
      %p245 = por %p243, %p244
      %p246 = scmp.ne.s32.totalorder %s234, %s235
      %p247 = scmp.eq.s32.totalorder %s31, 1
      %p248 = por %p246, %p247
      %p250 = scmp.ne.s32.totalorder %s235, %s249
      %p251 = scmp.eq.s32.totalorder %s31, 0
      %p252 = por %p250, %p251
      %s254 = sadd.s32 %s253, 1
      %p257 = scmp.eq.s32.totalorder %s25, 1
      %p258 = scmp.ne.s32.totalorder %s253, %s255
      %p259 = scmp.eq.s32.totalorder %s25, 0
      %p260 = por %p258, %p259
      %p261 = scmp.ne.s32.totalorder %s253, %s255
      %p262 = scmp.eq.s32.totalorder %s30, 1
      %p263 = por %p261, %p262
      %p264 = scmp.ne.s32.totalorder %s255, %s256
      %p265 = scmp.eq.s32.totalorder %s30, 0
      %p266 = por %p264, %p265
      %p267 = scmp.ne.s32.totalorder %s255, %s256
      %p268 = scmp.eq.s32.totalorder %s31, 1
      %p269 = por %p267, %p268
      %p271 = scmp.ne.s32.totalorder %s256, %s270
      %p272 = scmp.eq.s32.totalorder %s31, 0
      %p273 = por %p271, %p272
      %s275 = sadd.s32 %s274, 1
      %p278 = scmp.eq.s32.totalorder %s25, 1
      %p279 = scmp.ne.s32.totalorder %s274, %s276
      %p280 = scmp.eq.s32.totalorder %s25, 0
      %p281 = por %p279, %p280
      %p282 = scmp.ne.s32.totalorder %s274, %s276
      %p283 = scmp.eq.s32.totalorder %s30, 1
      %p284 = por %p282, %p283
      %p285 = scmp.ne.s32.totalorder %s276, %s277
      %p286 = scmp.eq.s32.totalorder %s30, 0
      %p287 = por %p285, %p286
      %p288 = scmp.ne.s32.totalorder %s276, %s277
      %p289 = scmp.eq.s32.totalorder %s31, 1
      %p290 = por %p288, %p289
      %p292 = scmp.ne.s32.totalorder %s277, %s291
      %p293 = scmp.eq.s32.totalorder %s31, 0
      %p294 = por %p292, %p293
      %s296 = sadd.s32 %s295, 1
      %p299 = scmp.eq.s32.totalorder %s25, 1
      %p300 = scmp.ne.s32.totalorder %s295, %s297
      %p301 = scmp.eq.s32.totalorder %s25, 0
      %p302 = por %p300, %p301
      %p303 = scmp.ne.s32.totalorder %s295, %s297
      %p304 = scmp.eq.s32.totalorder %s30, 1
      %p305 = por %p303, %p304
      %p306 = scmp.ne.s32.totalorder %s297, %s298
      %p307 = scmp.eq.s32.totalorder %s30, 0
      %p308 = por %p306, %p307
      %p309 = scmp.ne.s32.totalorder %s297, %s298
      %p310 = scmp.eq.s32.totalorder %s31, 1
      %p311 = por %p309, %p310
      %p313 = scmp.ne.s32.totalorder %s298, %s312
      %p314 = scmp.eq.s32.totalorder %s31, 0
      %p315 = por %p313, %p314
      %s317 = sadd.s32 %s316, 1
      %p320 = scmp.eq.s32.totalorder %s25, 1
      %p321 = scmp.ne.s32.totalorder %s316, %s318
      %p322 = scmp.eq.s32.totalorder %s25, 0
      %p323 = por %p321, %p322
      %p324 = scmp.ne.s32.totalorder %s316, %s318
      %p325 = scmp.eq.s32.totalorder %s30, 1
      %p326 = por %p324, %p325
      %p327 = scmp.ne.s32.totalorder %s318, %s319
      %p328 = scmp.eq.s32.totalorder %s30, 0
      %p329 = por %p327, %p328
      %p330 = scmp.ne.s32.totalorder %s318, %s319
      %p331 = scmp.eq.s32.totalorder %s31, 1
      %p332 = por %p330, %p331
      %p334 = scmp.ne.s32.totalorder %s319, %s333
      %p335 = scmp.eq.s32.totalorder %s31, 0
      %p336 = por %p334, %p335
      %s338 = sadd.s32 %s337, 1
      %p341 = scmp.eq.s32.totalorder %s25, 1
      %p342 = scmp.ne.s32.totalorder %s337, %s339
      %p343 = scmp.eq.s32.totalorder %s25, 0
      %p344 = por %p342, %p343
      %p345 = scmp.ne.s32.totalorder %s337, %s339
      %p346 = scmp.eq.s32.totalorder %s30, 1
      %p347 = por %p345, %p346
      %p348 = scmp.ne.s32.totalorder %s339, %s340
      %p349 = scmp.eq.s32.totalorder %s30, 0
      %p350 = por %p348, %p349
      %p351 = scmp.ne.s32.totalorder %s339, %s340
      %p352 = scmp.eq.s32.totalorder %s31, 1
      %p353 = por %p351, %p352
      %p355 = scmp.ne.s32.totalorder %s340, %s354
      %p356 = scmp.eq.s32.totalorder %s31, 0
      %p357 = por %p355, %p356
      %s359 = sadd.s32 %s358, 1
      %p362 = scmp.eq.s32.totalorder %s25, 1
      %p363 = scmp.ne.s32.totalorder %s358, %s360
      %p364 = scmp.eq.s32.totalorder %s25, 0
      %p365 = por %p363, %p364
      %p366 = scmp.ne.s32.totalorder %s358, %s360
      %p367 = scmp.eq.s32.totalorder %s30, 1
      %p368 = por %p366, %p367
      %p369 = scmp.ne.s32.totalorder %s360, %s361
      %p370 = scmp.eq.s32.totalorder %s30, 0
      %p371 = por %p369, %p370
      %p372 = scmp.ne.s32.totalorder %s360, %s361
      %p373 = scmp.eq.s32.totalorder %s31, 1
      %p374 = por %p372, %p373
      %p376 = scmp.ne.s32.totalorder %s361, %s375
      %p377 = scmp.eq.s32.totalorder %s31, 0
      %p378 = por %p376, %p377
      %s379 = ssub.s32 %s25, %s32
      %p380 = scmp.eq.s32.totalorder %s379, 0
      %s382 = sadd.s32 %s381, 1
      %s383 = scalar_select %p380, %s381, %s382
      %p386 = pneg %p380
      %p387 = scmp.eq.s32.totalorder %s25, 1
      %p388 = por %p386, %p387
      %p389 = scmp.ne.s32.totalorder %s381, %s384
      %p390 = scmp.eq.s32.totalorder %s25, 0
      %p391 = por %p389, %p390
      %p392 = scmp.ne.s32.totalorder %s381, %s384
      %p393 = scmp.eq.s32.totalorder %s30, 1
      %p394 = por %p392, %p393
      %p395 = scmp.ne.s32.totalorder %s384, %s385
      %p396 = scmp.eq.s32.totalorder %s30, 0
      %p397 = por %p395, %p396
      %p398 = scmp.ne.s32.totalorder %s384, %s385
      %p399 = scmp.eq.s32.totalorder %s31, 1
      %p400 = por %p398, %p399
      %p402 = scmp.ne.s32.totalorder %s385, %s401
      %p403 = scmp.eq.s32.totalorder %s31, 0
      %p404 = por %p402, %p403
      %p405 = scmp.le.s32.totalorder 1, %s25
      %p406 = scmp.lt.s32.totalorder %s25, 3
      %p407 = pnand %p405, %p406
      %p408 = pneg %p407
      // Predicated region
      $region9: #{tpu_custom_call.1} parent=5 // pred_check
        _
      $region10: #{tpu_custom_call.1} parent=5 // pred_check_branch
        %410 = sbr.rel (%p407) target = $region12
      $region11: #{tpu_custom_call.1} parent=5 // pred_region
        %s411 = ssub.s32 %s25, 1
        // Predicated region
        $region13: #{tpu_custom_call.1} parent=11 // pred_check
          %p412 = pneg %p98
        $region14: #{tpu_custom_call.1} parent=11 // pred_check_branch
          %414 = sbr.rel (%p412) target = $region16
        $region15: #{tpu_custom_call.1} parent=11 // pred_region
          _
        $region16: #{tpu_custom_call.1} parent=11 // pred_fallthru
          _
        // Predicated region
        $region17: #{tpu_custom_call.1} parent=11 // pred_check
          %p415 = pneg %p119
        $region18: #{tpu_custom_call.1} parent=11 // pred_check_branch
          %417 = sbr.rel (%p415) target = $region20
        $region19: #{tpu_custom_call.1} parent=11 // pred_region
          _
        $region20: #{tpu_custom_call.1} parent=11 // pred_fallthru
          _
        // Predicated region
        $region21: #{tpu_custom_call.1} parent=11 // pred_check
          %p418 = pneg %p140
        $region22: #{tpu_custom_call.1} parent=11 // pred_check_branch
          %420 = sbr.rel (%p418) target = $region24
        $region23: #{tpu_custom_call.1} parent=11 // pred_region
          _
        $region24: #{tpu_custom_call.1} parent=11 // pred_fallthru
          _
        // Predicated region
        $region25: #{tpu_custom_call.1} parent=11 // pred_check
          %p421 = pneg %p161
        $region26: #{tpu_custom_call.1} parent=11 // pred_check_branch
          %423 = sbr.rel (%p421) target = $region28
        $region27: #{tpu_custom_call.1} parent=11 // pred_region
          _
        $region28: #{tpu_custom_call.1} parent=11 // pred_fallthru
          _
        // Predicated region
        $region29: #{tpu_custom_call.1} parent=11 // pred_check
          %p424 = pneg %p182
        $region30: #{tpu_custom_call.1} parent=11 // pred_check_branch
          %426 = sbr.rel (%p424) target = $region32
        $region31: #{tpu_custom_call.1} parent=11 // pred_region
          _
        $region32: #{tpu_custom_call.1} parent=11 // pred_fallthru
          _
        // Predicated region
        $region33: #{tpu_custom_call.1} parent=11 // pred_check
          %p427 = pneg %p203
        $region34: #{tpu_custom_call.1} parent=11 // pred_check_branch
          %429 = sbr.rel (%p427) target = $region36
        $region35: #{tpu_custom_call.1} parent=11 // pred_region
          _
        $region36: #{tpu_custom_call.1} parent=11 // pred_fallthru
          _
        // Predicated region
        $region37: #{tpu_custom_call.1} parent=11 // pred_check
          %p430 = pneg %p224
        $region38: #{tpu_custom_call.1} parent=11 // pred_check_branch
          %432 = sbr.rel (%p430) target = $region40
        $region39: #{tpu_custom_call.1} parent=11 // pred_region
          _
        $region40: #{tpu_custom_call.1} parent=11 // pred_fallthru
          _
        // Predicated region
        $region41: #{tpu_custom_call.1} parent=11 // pred_check
          %p433 = pneg %p245
        $region42: #{tpu_custom_call.1} parent=11 // pred_check_branch
          %435 = sbr.rel (%p433) target = $region44
        $region43: #{tpu_custom_call.1} parent=11 // pred_region
          _
        $region44: #{tpu_custom_call.1} parent=11 // pred_fallthru
          _
        // Predicated region
        $region45: #{tpu_custom_call.1} parent=11 // pred_check
          %p436 = pneg %p266
        $region46: #{tpu_custom_call.1} parent=11 // pred_check_branch
          %438 = sbr.rel (%p436) target = $region48
        $region47: #{tpu_custom_call.1} parent=11 // pred_region
          _
        $region48: #{tpu_custom_call.1} parent=11 // pred_fallthru
          _
        // Predicated region
        $region49: #{tpu_custom_call.1} parent=11 // pred_check
          %p439 = pneg %p287
        $region50: #{tpu_custom_call.1} parent=11 // pred_check_branch
          %441 = sbr.rel (%p439) target = $region52
        $region51: #{tpu_custom_call.1} parent=11 // pred_region
          _
        $region52: #{tpu_custom_call.1} parent=11 // pred_fallthru
          _
        // Predicated region
        $region53: #{tpu_custom_call.1} parent=11 // pred_check
          %p442 = pneg %p308
        $region54: #{tpu_custom_call.1} parent=11 // pred_check_branch
          %444 = sbr.rel (%p442) target = $region56
        $region55: #{tpu_custom_call.1} parent=11 // pred_region
          _
        $region56: #{tpu_custom_call.1} parent=11 // pred_fallthru
          _
        // Predicated region
        $region57: #{tpu_custom_call.1} parent=11 // pred_check
          %p445 = pneg %p329
        $region58: #{tpu_custom_call.1} parent=11 // pred_check_branch
          %447 = sbr.rel (%p445) target = $region60
        $region59: #{tpu_custom_call.1} parent=11 // pred_region
          _
        $region60: #{tpu_custom_call.1} parent=11 // pred_fallthru
          _
        // Predicated region
        $region61: #{tpu_custom_call.1} parent=11 // pred_check
          %p448 = pneg %p350
        $region62: #{tpu_custom_call.1} parent=11 // pred_check_branch
          %450 = sbr.rel (%p448) target = $region64
        $region63: #{tpu_custom_call.1} parent=11 // pred_region
          _
        $region64: #{tpu_custom_call.1} parent=11 // pred_fallthru
          _
        // Predicated region
        $region65: #{tpu_custom_call.1} parent=11 // pred_check
          %p451 = pneg %p371
        $region66: #{tpu_custom_call.1} parent=11 // pred_check_branch
          %453 = sbr.rel (%p451) target = $region68
        $region67: #{tpu_custom_call.1} parent=11 // pred_region
          _
        $region68: #{tpu_custom_call.1} parent=11 // pred_fallthru
          _
      $region12: #{tpu_custom_call.1} parent=5 // pred_fallthru
        _
      %p454 = scmp.lt.s32.totalorder %s25, 2
      // Predicated region
      $region69: #{tpu_custom_call.1} parent=5 // pred_check
        %p455 = pneg %p454
      $region70: #{tpu_custom_call.1} parent=5 // pred_check_branch
        %457 = sbr.rel (%p455) target = $region72
      $region71: #{tpu_custom_call.1} parent=5 // pred_region
        // Predicated region
        $region73: #{tpu_custom_call.1} parent=71 // pred_check
          %p458 = pneg %p45
        $region74: #{tpu_custom_call.1} parent=71 // pred_check_branch
          %460 = sbr.rel (%p458) target = $region76
        $region75: #{tpu_custom_call.1} parent=71 // pred_region
          %p461 = scmp.lt.s32.totalorder %s25, 1
          %s462 = scalar_select %p461, %s25, 1
          %s463 = smul.addr %s462, 8
          %s464 = scalar_lea.vmem %s0, %s463
        $region76: #{tpu_custom_call.1} parent=71 // pred_fallthru
          _
        // Predicated region
        $region77: #{tpu_custom_call.1} parent=71 // pred_check
          %p465 = pneg %p71
        $region78: #{tpu_custom_call.1} parent=71 // pred_check_branch
          %467 = sbr.rel (%p465) target = $region80
        $region79: #{tpu_custom_call.1} parent=71 // pred_region
          %p468 = scmp.lt.s32.totalorder %s25, 1
          %s469 = scalar_select %p468, %s25, 1
          %s470 = smul.addr %s469, 8
          %s471 = scalar_lea.vmem %s1, %s470
        $region80: #{tpu_custom_call.1} parent=71 // pred_fallthru
          _
      $region72: #{tpu_custom_call.1} parent=5 // pred_fallthru
        _
      %p472 = scmp.le.s32.totalorder 1, %s25
      %p473 = scmp.lt.s32.totalorder %s25, 3
      %p474 = pnand %p472, %p473
      %p475 = pneg %p474
      // Predicated region
      $region81: #{tpu_custom_call.1} parent=5 // pred_check
        _
      $region82: #{tpu_custom_call.1} parent=5 // pred_check_branch
        %477 = sbr.rel (%p474) target = $region84
      $region83: #{tpu_custom_call.1} parent=5 // pred_region
        %s478 = ssub.s32 %s25, 1
        %p479 = scmp.lt.s32.totalorder %s30, 1
        %s480 = scalar_select %p479, %s30, 1
        %s481 = smul.addr %s480, 8
        %s482 = scalar_lea.vmem %s0, %s481
        %p483 = pneg %p51
        %p484 = pneg %p48
        %p485 = scmp.lt.s32.totalorder %s30, 1
        %s486 = scalar_select %p485, %s30, 1
        %s487 = smul.addr %s486, 8
        %s488 = scalar_lea.vmem %s1, %s487
        %p489 = pneg %p77
        %p490 = pneg %p74
        %p491 = pneg %p98
        %p492 = pneg %p95
        %p493 = pneg %p119
        %p494 = pneg %p116
        %p495 = pneg %p140
        %p496 = pneg %p137
        %p497 = pneg %p161
        %p498 = pneg %p158
        %p499 = pneg %p182
        %p500 = pneg %p179
        %p501 = pneg %p203
        %p502 = pneg %p200
        %p503 = pneg %p224
        %p504 = pneg %p221
        %p505 = pneg %p245
        %p506 = pneg %p242
        %p507 = pneg %p266
        %p508 = pneg %p263
        %p509 = pneg %p287
        %p510 = pneg %p284
        %p511 = pneg %p308
        %p512 = pneg %p305
        %p513 = pneg %p329
        %p514 = pneg %p326
        %p515 = pneg %p350
        %p516 = pneg %p347
        %p517 = pneg %p371
        %p518 = pneg %p368
        %p519 = pneg %p397
        %p520 = pneg %p394
        %s521 = sand.u32 %s384, 1
        %s522 = scalar_lea.sflag [#allocation3], %s521
        %s523 = sand.u32 %s384, 1
        %s524 = smul.addr %s523, 8
        %s525 = scalar_lea.vmem [#allocation2], %s524
        %p526 = scmp.lt.s32.totalorder %s30, 1
        %s527 = scalar_select %p526, %s30, 1
        %s528 = smul.addr %s527, 8
        %s529 = scalar_lea.vmem %s0, %s528
        %p530 = scmp.lt.s32.totalorder %s30, 1
        %s531 = scalar_select %p530, %s30, 1
        %s532 = smul.addr %s531, 8
        %s533 = scalar_lea.vmem %s1, %s532
        %v535 = vld [vmem:[%s529] sm:$0xff]
        %v536 = vld [vmem:[%s533] sm:$0xff]
        %v537 = vadd.f32 %v535, %v536
        %v538 = vpack.c.bf16 %v537, %v537
        %v539 = vpack.c.bf16 %v535, %v535
        %v540 = vld [vmem:[%s2] sm:$0xf]
        %v541 = vld [vmem:[%s2 + $0x4] sm:$0xf]
        %v542 = vld [vmem:[%s2 + $0x8] sm:$0xf]
        %v543 = vld [vmem:[%s2 + $0xc] sm:$0xf]
        %v544 = vld [vmem:[%s2 + $0x10] sm:$0xf]
        %v545 = vld [vmem:[%s2 + $0x14] sm:$0xf]
        %v546 = vld [vmem:[%s2 + $0x18] sm:$0xf]
        %v547 = vld [vmem:[%s2 + $0x1c] sm:$0xf]
        %v548 = vld [vmem:[%s3] sm:$0xff]
        %v549 = vld [vmem:[%s3 + $0x8] sm:$0xff]
        %v550 = vld [vmem:[%s3 + $0x10] sm:$0xff]
        %v551 = vld [vmem:[%s3 + $0x18] sm:$0xff]
        %v552 = vld [vmem:[%s3 + $0x20] sm:$0xff]
        %v553 = vld [vmem:[%s3 + $0x28] sm:$0xff]
        %v554 = vld [vmem:[%s3 + $0x30] sm:$0xff]
        %v555 = vld [vmem:[%s3 + $0x38] sm:$0xff]
        %557 = vset.pattern.permute.xlu0 0
        %558 = vperm.xlu0 %557, %v548
        %v559 = vpop.permute.xlu0 %558
        %562 = vset.pattern.permute.xlu0 0
        %563 = vperm.xlu0 %562, %v549
        %v564 = vpop.permute.xlu0 %563
        %567 = vset.pattern.permute.xlu0 0
        %568 = vperm.xlu0 %567, %v550
        %v569 = vpop.permute.xlu0 %568
        %572 = vset.pattern.permute.xlu0 0
        %573 = vperm.xlu0 %572, %v551
        %v574 = vpop.permute.xlu0 %573
        %577 = vset.pattern.permute.xlu0 0
        %578 = vperm.xlu0 %577, %v552
        %v579 = vpop.permute.xlu0 %578
        %582 = vset.pattern.permute.xlu0 0
        %583 = vperm.xlu0 %582, %v553
        %v584 = vpop.permute.xlu0 %583
        %587 = vset.pattern.permute.xlu0 0
        %588 = vperm.xlu0 %587, %v554
        %v589 = vpop.permute.xlu0 %588
        %592 = vset.pattern.permute.xlu0 0
        %593 = vperm.xlu0 %592, %v555
        %v594 = vpop.permute.xlu0 %593
        %v604 = vunpack.c.l.b16 %v540
        %v605 = vunpack.c.l.b16 %v541
        %v606 = vunpack.c.l.b16 %v542
        %v607 = vunpack.c.l.b16 %v543
        %v608 = vunpack.c.l.b16 %v544
        %v609 = vunpack.c.l.b16 %v545
        %v610 = vunpack.c.l.b16 %v546
        %v611 = vunpack.c.l.b16 %v547
        %v612 = vpack.c.b16 %v605, %v604
        %v613 = vpack.c.b16 %v607, %v606
        %v614 = vpack.c.b16 %v609, %v608
        %v615 = vpack.c.b16 %v611, %v610
        %vm616 = vcmask 261120
        %v618 = vsel %vm616, %v612, 0
        %v621 = vsel %vm616, %v613, 0
        %v624 = vsel %vm616, %v614, 0
        %v627 = vsel %vm616, %v615, 0
        %v630 = vsel %vm616, %v538, 0
        %632 = vmatprep.subr.bf16.mxu0 0
        %633 = vmatpush1.bf16.xpose.msra.mxu0 0
        %634 = vmatprep.subr.bf16.mxu0 0
        %635 = vmatpush1.bf16.xpose.msra.mxu0 0
        %636 = vmatprep.subr.bf16.mxu0 0
        %637 = vmatpush1.bf16.xpose.msra.mxu0 0
        %638 = vmatprep.subr.bf16.mxu0 0
        %639 = vmatpush1.bf16.xpose.msra.mxu0 0
        %640 = vmatprep.subr.bf16.mxu0 0
        %641 = vmatpush1.bf16.xpose.msra.mxu0 0
        %642 = vmatprep.subr.bf16.mxu0 0
        %643 = vmatpush1.bf16.xpose.msra.mxu0 0
        %644 = vmatprep.subr.bf16.mxu0 0
        %645 = vmatpush1.bf16.xpose.msra.mxu0 0
        %646 = vmatprep.subr.bf16.mxu0 0
        %647 = vmatpush1.bf16.xpose.msra.mxu0 %v630
        %648 = vmatprep.subr.bf16.mxu0 0
        %649 = vmatpush2.bf16.xpose.msra.mxu0 0
        %650 = vmatprep.subr.bf16.mxu0 0
        %651 = vmatpush2.bf16.xpose.msra.mxu0 0
        %652 = vmatprep.subr.bf16.mxu0 0
        %653 = vmatpush2.bf16.xpose.msra.mxu0 0
        %654 = vmatprep.subr.bf16.mxu0 0
        %655 = vmatpush2.bf16.xpose.msra.mxu0 0
        %656 = vmatprep.subr.bf16.mxu0 0
        %657 = vmatpush2.bf16.xpose.msra.mxu0 0
        %658 = vmatprep.subr.bf16.mxu0 0
        %659 = vmatpush2.bf16.xpose.msra.mxu0 0
        %660 = vmatprep.subr.bf16.mxu0 0
        %661 = vmatpush2.bf16.xpose.msra.mxu0 0
        %662 = vmatprep.subr.bf16.mxu0 0
        %663 = vmatpush2.bf16.xpose.msra.mxu0 0
        %664 = vmatprep.mubr.bf16.mxu0 0
        %665 = vmatmul.mubr.bf16.gmra.mxu0 %v618
        %v666 = vpop.f32.mrf.mxu0
        %v667 = vadd.f32 %v559, %v666
        %v668 = vpop.f32.mrf.mxu0
        %v669 = vpop.f32.mrf.mxu0
        %v670 = vadd.f32 %v564, %v669
        %v671 = vpop.f32.mrf.mxu0
        %672 = vmatprep.mubr.bf16.mxu0 0
        %673 = vmatmul.mubr.bf16.gmra.mxu0 %v621
        %v674 = vpop.f32.mrf.mxu0
        %v675 = vadd.f32 %v569, %v674
        %v676 = vpop.f32.mrf.mxu0
        %v677 = vpop.f32.mrf.mxu0
        %v678 = vadd.f32 %v574, %v677
        %v679 = vpop.f32.mrf.mxu0
        %680 = vmatprep.mubr.bf16.mxu0 0
        %681 = vmatmul.mubr.bf16.gmra.mxu0 %v624
        %v682 = vpop.f32.mrf.mxu0
        %v683 = vadd.f32 %v579, %v682
        %v684 = vpop.f32.mrf.mxu0
        %v685 = vpop.f32.mrf.mxu0
        %v686 = vadd.f32 %v584, %v685
        %v687 = vpop.f32.mrf.mxu0
        %688 = vmatprep.mubr.bf16.mxu0 0
        %689 = vmatmul.mubr.bf16.gmra.mxu0 %v627
        %v690 = vpop.f32.mrf.mxu0
        %v691 = vadd.f32 %v589, %v690
        %v692 = vpop.f32.mrf.mxu0
        %v693 = vpop.f32.mrf.mxu0
        %v694 = vadd.f32 %v594, %v693
        %v695 = vpop.f32.mrf.mxu0
        %696 = vdwg.mxu0
        %v697 = vld [vmem:[%s4] sm:$0xf]
        %v698 = vld [vmem:[%s4 + $0x4] sm:$0xf]
        %v699 = vld [vmem:[%s4 + $0x8] sm:$0xf]
        %v700 = vld [vmem:[%s4 + $0xc] sm:$0xf]
        %v701 = vld [vmem:[%s5] sm:$0xff]
        %v702 = vld [vmem:[%s5 + $0x8] sm:$0xff]
        %v703 = vld [vmem:[%s5 + $0x10] sm:$0xff]
        %v704 = vld [vmem:[%s5 + $0x18] sm:$0xff]
        %706 = vset.pattern.permute.xlu0 0
        %707 = vperm.xlu0 %706, %v701
        %v708 = vpop.permute.xlu0 %707
        %711 = vset.pattern.permute.xlu0 0
        %712 = vperm.xlu0 %711, %v702
        %v713 = vpop.permute.xlu0 %712
        %716 = vset.pattern.permute.xlu0 0
        %717 = vperm.xlu0 %716, %v703
        %v718 = vpop.permute.xlu0 %717
        %721 = vset.pattern.permute.xlu0 0
        %722 = vperm.xlu0 %721, %v704
        %v723 = vpop.permute.xlu0 %722
        %v729 = vunpack.c.l.b16 %v697
        %v730 = vunpack.c.l.b16 %v698
        %v731 = vunpack.c.l.b16 %v699
        %v732 = vunpack.c.l.b16 %v700
        %v733 = vpack.c.b16 %v730, %v729
        %v734 = vpack.c.b16 %v732, %v731
        %v736 = vsel %vm616, %v733, 0
        %v739 = vsel %vm616, %v734, 0
        %v742 = vsel %vm616, %v539, 0
        %744 = vmatprep.subr.bf16.mxu0 0
        %745 = vmatpush1.bf16.xpose.msra.mxu0 0
        %746 = vmatprep.subr.bf16.mxu0 0
        %747 = vmatpush1.bf16.xpose.msra.mxu0 0
        %748 = vmatprep.subr.bf16.mxu0 0
        %749 = vmatpush1.bf16.xpose.msra.mxu0 0
        %750 = vmatprep.subr.bf16.mxu0 0
        %751 = vmatpush1.bf16.xpose.msra.mxu0 0
        %752 = vmatprep.subr.bf16.mxu0 0
        %753 = vmatpush1.bf16.xpose.msra.mxu0 0
        %754 = vmatprep.subr.bf16.mxu0 0
        %755 = vmatpush1.bf16.xpose.msra.mxu0 0
        %756 = vmatprep.subr.bf16.mxu0 0
        %757 = vmatpush1.bf16.xpose.msra.mxu0 0
        %758 = vmatprep.subr.bf16.mxu0 0
        %759 = vmatpush1.bf16.xpose.msra.mxu0 %v742
        %760 = vmatprep.subr.bf16.mxu0 0
        %761 = vmatpush2.bf16.xpose.msra.mxu0 0
        %762 = vmatprep.subr.bf16.mxu0 0
        %763 = vmatpush2.bf16.xpose.msra.mxu0 0
        %764 = vmatprep.subr.bf16.mxu0 0
        %765 = vmatpush2.bf16.xpose.msra.mxu0 0
        %766 = vmatprep.subr.bf16.mxu0 0
        %767 = vmatpush2.bf16.xpose.msra.mxu0 0
        %768 = vmatprep.subr.bf16.mxu0 0
        %769 = vmatpush2.bf16.xpose.msra.mxu0 0
        %770 = vmatprep.subr.bf16.mxu0 0
        %771 = vmatpush2.bf16.xpose.msra.mxu0 0
        %772 = vmatprep.subr.bf16.mxu0 0
        %773 = vmatpush2.bf16.xpose.msra.mxu0 0
        %774 = vmatprep.subr.bf16.mxu0 0
        %775 = vmatpush2.bf16.xpose.msra.mxu0 0
        %776 = vmatprep.mubr.bf16.mxu0 0
        %777 = vmatmul.mubr.bf16.gmra.mxu0 %v736
        %v778 = vpop.f32.mrf.mxu0
        %v779 = vadd.f32 %v708, %v778
        %v780 = vpop.f32.mrf.mxu0
        %v781 = vpop.f32.mrf.mxu0
        %v782 = vadd.f32 %v713, %v781
        %v783 = vpop.f32.mrf.mxu0
        %784 = vmatprep.mubr.bf16.mxu0 0
        %785 = vmatmul.mubr.bf16.gmra.mxu0 %v739
        %v786 = vpop.f32.mrf.mxu0
        %v787 = vadd.f32 %v718, %v786
        %v788 = vpop.f32.mrf.mxu0
        %v789 = vpop.f32.mrf.mxu0
        %v790 = vadd.f32 %v723, %v789
        %v791 = vpop.f32.mrf.mxu0
        %792 = vdwg.mxu0
        %v793 = vpack.c.bf16 %v667, %v667
        %v794 = vpack.c.bf16 %v670, %v670
        %v795 = vpack.c.bf16 %v675, %v675
        %v796 = vpack.c.bf16 %v678, %v678
        %v797 = vpack.c.bf16 %v683, %v683
        %v798 = vpack.c.bf16 %v686, %v686
        %v799 = vpack.c.bf16 %v691, %v691
        %v800 = vpack.c.bf16 %v694, %v694
        %v801 = vpack.c.bf16 %v779, %v779
        %v802 = vpack.c.bf16 %v782, %v782
        %v803 = vpack.c.bf16 %v787, %v787
        %v804 = vpack.c.bf16 %v790, %v790
        %805 = vxpose.xlu0.c.b16.start [1/8] %v793, 128
        %806 = vxpose.xlu0.c.b16.cont [2/8] 0, 128
        %807 = vxpose.xlu0.c.b16.cont [3/8] 0, 128
        %808 = vxpose.xlu0.c.b16.cont [4/8] 0, 128
        %809 = vxpose.xlu0.c.b16.cont [5/8] 0, 128
        %810 = vxpose.xlu0.c.b16.cont [6/8] 0, 128
        %811 = vxpose.xlu0.c.b16.cont [7/8] 0, 128
        %812 = vxpose.xlu0.c.b16.end [8/8] 0, 128
        %v813 = vpop.trf.xlu0
        %v814 = vpop.trf.xlu0
        %v815 = vpop.trf.xlu0
        %v816 = vpop.trf.xlu0
        %v817 = vpop.trf.xlu0
        %v818 = vpop.trf.xlu0
        %v819 = vpop.trf.xlu0
        %v820 = vpop.trf.xlu0
        %vm821 = vcmask 64512
        %v823 = vsel %vm821, %v813, 0
        %vm825 = vcmask 1043456
        %v827 = vsel %vm825, %v797, 0
        %829 = vmatprep.subr.bf16.mxu0 0
        %830 = vmatpush1.bf16.msra.mxu0 0
        %831 = vmatprep.subr.bf16.mxu0 0
        %832 = vmatpush1.bf16.msra.mxu0 0
        %833 = vmatprep.subr.bf16.mxu0 0
        %834 = vmatpush1.bf16.msra.mxu0 0
        %835 = vmatprep.subr.bf16.mxu0 0
        %836 = vmatpush1.bf16.msra.mxu0 0
        %837 = vmatprep.subr.bf16.mxu0 0
        %838 = vmatpush1.bf16.msra.mxu0 0
        %839 = vmatprep.subr.bf16.mxu0 0
        %840 = vmatpush1.bf16.msra.mxu0 0
        %841 = vmatprep.subr.bf16.mxu0 0
        %842 = vmatpush1.bf16.msra.mxu0 0
        %843 = vmatprep.subr.bf16.mxu0 0
        %844 = vmatpush1.bf16.msra.mxu0 %v827
        %845 = vmatprep.subr.bf16.mxu0 0
        %846 = vmatpush2.bf16.msra.mxu0 0
        %847 = vmatprep.subr.bf16.mxu0 0
        %848 = vmatpush2.bf16.msra.mxu0 0
        %849 = vmatprep.subr.bf16.mxu0 0
        %850 = vmatpush2.bf16.msra.mxu0 0
        %851 = vmatprep.subr.bf16.mxu0 0
        %852 = vmatpush2.bf16.msra.mxu0 0
        %853 = vmatprep.subr.bf16.mxu0 0
        %854 = vmatpush2.bf16.msra.mxu0 0
        %855 = vmatprep.subr.bf16.mxu0 0
        %856 = vmatpush2.bf16.msra.mxu0 0
        %857 = vmatprep.subr.bf16.mxu0 0
        %858 = vmatpush2.bf16.msra.mxu0 0
        %859 = vmatprep.subr.bf16.mxu0 0
        %860 = vmatpush2.bf16.msra.mxu0 0
        %861 = vmatprep.mubr.bf16.mxu0 0
        %862 = vmatmul.mubr.bf16.gmra.mxu0 %v823
        %v863 = vpop.f32.mrf.mxu0
        %v864 = vadd.f32 0.0, %v863
        %v865 = vpop.f32.mrf.mxu0
        %v866 = vpop.f32.mrf.mxu0
        %v867 = vpop.f32.mrf.mxu0
        %868 = vdwg.mxu0
        %869 = vxpose.xlu0.c.b16.start [1/8] %v794, 128
        %870 = vxpose.xlu0.c.b16.cont [2/8] 0, 128
        %871 = vxpose.xlu0.c.b16.cont [3/8] 0, 128
        %872 = vxpose.xlu0.c.b16.cont [4/8] 0, 128
        %873 = vxpose.xlu0.c.b16.cont [5/8] 0, 128
        %874 = vxpose.xlu0.c.b16.cont [6/8] 0, 128
        %875 = vxpose.xlu0.c.b16.cont [7/8] 0, 128
        %876 = vxpose.xlu0.c.b16.end [8/8] 0, 128
        %v877 = vpop.trf.xlu0
        %v878 = vpop.trf.xlu0
        %v879 = vpop.trf.xlu0
        %v880 = vpop.trf.xlu0
        %v881 = vpop.trf.xlu0
        %v882 = vpop.trf.xlu0
        %v883 = vpop.trf.xlu0
        %v884 = vpop.trf.xlu0
        %v886 = vsel %vm821, %v877, 0
        %v889 = vsel %vm825, %v798, 0
        %891 = vmatprep.subr.bf16.mxu0 0
        %892 = vmatpush1.bf16.msra.mxu0 0
        %893 = vmatprep.subr.bf16.mxu0 0
        %894 = vmatpush1.bf16.msra.mxu0 0
        %895 = vmatprep.subr.bf16.mxu0 0
        %896 = vmatpush1.bf16.msra.mxu0 0
        %897 = vmatprep.subr.bf16.mxu0 0
        %898 = vmatpush1.bf16.msra.mxu0 0
        %899 = vmatprep.subr.bf16.mxu0 0
        %900 = vmatpush1.bf16.msra.mxu0 0
        %901 = vmatprep.subr.bf16.mxu0 0
        %902 = vmatpush1.bf16.msra.mxu0 0
        %903 = vmatprep.subr.bf16.mxu0 0
        %904 = vmatpush1.bf16.msra.mxu0 0
        %905 = vmatprep.subr.bf16.mxu0 0
        %906 = vmatpush1.bf16.msra.mxu0 %v889
        %907 = vmatprep.subr.bf16.mxu0 0
        %908 = vmatpush2.bf16.msra.mxu0 0
        %909 = vmatprep.subr.bf16.mxu0 0
        %910 = vmatpush2.bf16.msra.mxu0 0
        %911 = vmatprep.subr.bf16.mxu0 0
        %912 = vmatpush2.bf16.msra.mxu0 0
        %913 = vmatprep.subr.bf16.mxu0 0
        %914 = vmatpush2.bf16.msra.mxu0 0
        %915 = vmatprep.subr.bf16.mxu0 0
        %916 = vmatpush2.bf16.msra.mxu0 0
        %917 = vmatprep.subr.bf16.mxu0 0
        %918 = vmatpush2.bf16.msra.mxu0 0
        %919 = vmatprep.subr.bf16.mxu0 0
        %920 = vmatpush2.bf16.msra.mxu0 0
        %921 = vmatprep.subr.bf16.mxu0 0
        %922 = vmatpush2.bf16.msra.mxu0 0
        %923 = vmatprep.mubr.bf16.mxu0 0
        %924 = vmatmul.mubr.bf16.gmra.mxu0 %v886
        %v925 = vpop.f32.mrf.mxu0
        %v926 = vadd.f32 0.0, %v925
        %v927 = vpop.f32.mrf.mxu0
        %v928 = vpop.f32.mrf.mxu0
        %v929 = vpop.f32.mrf.mxu0
        %930 = vdwg.mxu0
        %931 = vxpose.xlu0.c.b16.start [1/8] %v795, 128
        %932 = vxpose.xlu0.c.b16.cont [2/8] 0, 128
        %933 = vxpose.xlu0.c.b16.cont [3/8] 0, 128
        %934 = vxpose.xlu0.c.b16.cont [4/8] 0, 128
        %935 = vxpose.xlu0.c.b16.cont [5/8] 0, 128
        %936 = vxpose.xlu0.c.b16.cont [6/8] 0, 128
        %937 = vxpose.xlu0.c.b16.cont [7/8] 0, 128
        %938 = vxpose.xlu0.c.b16.end [8/8] 0, 128
        %v939 = vpop.trf.xlu0
        %v940 = vpop.trf.xlu0
        %v941 = vpop.trf.xlu0
        %v942 = vpop.trf.xlu0
        %v943 = vpop.trf.xlu0
        %v944 = vpop.trf.xlu0
        %v945 = vpop.trf.xlu0
        %v946 = vpop.trf.xlu0
        %v948 = vsel %vm821, %v939, 0
        %v951 = vsel %vm825, %v799, 0
        %953 = vmatprep.subr.bf16.mxu0 0
        %954 = vmatpush1.bf16.msra.mxu0 0
        %955 = vmatprep.subr.bf16.mxu0 0
        %956 = vmatpush1.bf16.msra.mxu0 0
        %957 = vmatprep.subr.bf16.mxu0 0
        %958 = vmatpush1.bf16.msra.mxu0 0
        %959 = vmatprep.subr.bf16.mxu0 0
        %960 = vmatpush1.bf16.msra.mxu0 0
        %961 = vmatprep.subr.bf16.mxu0 0
        %962 = vmatpush1.bf16.msra.mxu0 0
        %963 = vmatprep.subr.bf16.mxu0 0
        %964 = vmatpush1.bf16.msra.mxu0 0
        %965 = vmatprep.subr.bf16.mxu0 0
        %966 = vmatpush1.bf16.msra.mxu0 0
        %967 = vmatprep.subr.bf16.mxu0 0
        %968 = vmatpush1.bf16.msra.mxu0 %v951
        %969 = vmatprep.subr.bf16.mxu0 0
        %970 = vmatpush2.bf16.msra.mxu0 0
        %971 = vmatprep.subr.bf16.mxu0 0
        %972 = vmatpush2.bf16.msra.mxu0 0
        %973 = vmatprep.subr.bf16.mxu0 0
        %974 = vmatpush2.bf16.msra.mxu0 0
        %975 = vmatprep.subr.bf16.mxu0 0
        %976 = vmatpush2.bf16.msra.mxu0 0
        %977 = vmatprep.subr.bf16.mxu0 0
        %978 = vmatpush2.bf16.msra.mxu0 0
        %979 = vmatprep.subr.bf16.mxu0 0
        %980 = vmatpush2.bf16.msra.mxu0 0
        %981 = vmatprep.subr.bf16.mxu0 0
        %982 = vmatpush2.bf16.msra.mxu0 0
        %983 = vmatprep.subr.bf16.mxu0 0
        %984 = vmatpush2.bf16.msra.mxu0 0
        %985 = vmatprep.mubr.bf16.mxu0 0
        %986 = vmatmul.mubr.bf16.gmra.mxu0 %v948
        %v987 = vpop.f32.mrf.mxu0
        %v988 = vadd.f32 0.0, %v987
        %v989 = vpop.f32.mrf.mxu0
        %v990 = vpop.f32.mrf.mxu0
        %v991 = vpop.f32.mrf.mxu0
        %992 = vdwg.mxu0
        %993 = vxpose.xlu0.c.b16.start [1/8] %v796, 128
        %994 = vxpose.xlu0.c.b16.cont [2/8] 0, 128
        %995 = vxpose.xlu0.c.b16.cont [3/8] 0, 128
        %996 = vxpose.xlu0.c.b16.cont [4/8] 0, 128
        %997 = vxpose.xlu0.c.b16.cont [5/8] 0, 128
        %998 = vxpose.xlu0.c.b16.cont [6/8] 0, 128
        %999 = vxpose.xlu0.c.b16.cont [7/8] 0, 128
        %1000 = vxpose.xlu0.c.b16.end [8/8] 0, 128
        %v1001 = vpop.trf.xlu0
        %v1002 = vpop.trf.xlu0
        %v1003 = vpop.trf.xlu0
        %v1004 = vpop.trf.xlu0
        %v1005 = vpop.trf.xlu0
        %v1006 = vpop.trf.xlu0
        %v1007 = vpop.trf.xlu0
        %v1008 = vpop.trf.xlu0
        %v1010 = vsel %vm821, %v1001, 0
        %v1013 = vsel %vm825, %v800, 0
        %1015 = vmatprep.subr.bf16.mxu0 0
        %1016 = vmatpush1.bf16.msra.mxu0 0
        %1017 = vmatprep.subr.bf16.mxu0 0
        %1018 = vmatpush1.bf16.msra.mxu0 0
        %1019 = vmatprep.subr.bf16.mxu0 0
        %1020 = vmatpush1.bf16.msra.mxu0 0
        %1021 = vmatprep.subr.bf16.mxu0 0
        %1022 = vmatpush1.bf16.msra.mxu0 0
        %1023 = vmatprep.subr.bf16.mxu0 0
        %1024 = vmatpush1.bf16.msra.mxu0 0
        %1025 = vmatprep.subr.bf16.mxu0 0
        %1026 = vmatpush1.bf16.msra.mxu0 0
        %1027 = vmatprep.subr.bf16.mxu0 0
        %1028 = vmatpush1.bf16.msra.mxu0 0
        %1029 = vmatprep.subr.bf16.mxu0 0
        %1030 = vmatpush1.bf16.msra.mxu0 %v1013
        %1031 = vmatprep.subr.bf16.mxu0 0
        %1032 = vmatpush2.bf16.msra.mxu0 0
        %1033 = vmatprep.subr.bf16.mxu0 0
        %1034 = vmatpush2.bf16.msra.mxu0 0
        %1035 = vmatprep.subr.bf16.mxu0 0
        %1036 = vmatpush2.bf16.msra.mxu0 0
        %1037 = vmatprep.subr.bf16.mxu0 0
        %1038 = vmatpush2.bf16.msra.mxu0 0
        %1039 = vmatprep.subr.bf16.mxu0 0
        %1040 = vmatpush2.bf16.msra.mxu0 0
        %1041 = vmatprep.subr.bf16.mxu0 0
        %1042 = vmatpush2.bf16.msra.mxu0 0
        %1043 = vmatprep.subr.bf16.mxu0 0
        %1044 = vmatpush2.bf16.msra.mxu0 0
        %1045 = vmatprep.subr.bf16.mxu0 0
        %1046 = vmatpush2.bf16.msra.mxu0 0
        %1047 = vmatprep.mubr.bf16.mxu0 0
        %1048 = vmatmul.mubr.bf16.gmra.mxu0 %v1010
        %v1049 = vpop.f32.mrf.mxu0
        %v1050 = vadd.f32 0.0, %v1049
        %v1051 = vpop.f32.mrf.mxu0
        %v1052 = vpop.f32.mrf.mxu0
        %v1053 = vpop.f32.mrf.mxu0
        %1054 = vdwg.mxu0
        %v1055 = vmul.f32 %v864, 0.35355338
        %v1056 = vmul.f32 %v926, 0.35355338
        %v1057 = vmul.f32 %v988, 0.35355338
        %v1058 = vmul.f32 %v1050, 0.35355338
        %v1059 = vsel %vm821, %v1055, -inf
        %1060 = vmax.xlane.f32.xlu0 %v1059
        %v1061 = vpop.xlane.xlu0 %1060
        %v1062 = vsel %vm821, %v1056, -inf
        %1063 = vmax.xlane.f32.xlu0 %v1062
        %v1064 = vpop.xlane.xlu0 %1063
        %v1065 = vsel %vm821, %v1057, -inf
        %1066 = vmax.xlane.f32.xlu0 %v1065
        %v1067 = vpop.xlane.xlu0 %1066
        %v1068 = vsel %vm821, %v1058, -inf
        %1069 = vmax.xlane.f32.xlu0 %v1068
        %v1070 = vpop.xlane.xlu0 %1069
        %v1071 = vsub.f32 %v1055, %v1061
        %v1072 = vsub.f32 %v1056, %v1064
        %v1073 = vsub.f32 %v1057, %v1067
        %v1074 = vsub.f32 %v1058, %v1070
        %v1075 = vmul.f32 %v1071, 1.442695
        %v1076 = vpow.pop %v1075
        %v1077 = vmul.f32 %v1072, 1.442695
        %v1078 = vpow.pop %v1077
        %v1079 = vmul.f32 %v1073, 1.442695
        %v1080 = vpow.pop %v1079
        %v1081 = vmul.f32 %v1074, 1.442695
        %v1082 = vpow.pop %v1081
        %v1083 = vsel %vm821, %v1076, 0.0
        %1084 = vadd.xlane.f32.xlu0 %v1083
        %v1085 = vpop.xlane.xlu0 %1084
        %v1086 = vsel %vm821, %v1078, 0.0
        %1087 = vadd.xlane.f32.xlu0 %v1086
        %v1088 = vpop.xlane.xlu0 %1087
        %v1089 = vsel %vm821, %v1080, 0.0
        %1090 = vadd.xlane.f32.xlu0 %v1089
        %v1091 = vpop.xlane.xlu0 %1090
        %v1092 = vsel %vm821, %v1082, 0.0
        %1093 = vadd.xlane.f32.xlu0 %v1092
        %v1094 = vpop.xlane.xlu0 %1093
        %v1095 = vrcp.pop %v1085
        %v1096 = vmul.f32 %v1076, %v1095
        %v1097 = vrcp.pop %v1088
        %v1098 = vmul.f32 %v1078, %v1097
        %v1099 = vrcp.pop %v1091
        %v1100 = vmul.f32 %v1080, %v1099
        %v1101 = vrcp.pop %v1094
        %v1102 = vmul.f32 %v1082, %v1101
        %v1103 = vpack.c.bf16 %v1096, %v1096
        %v1104 = vpack.c.bf16 %v1098, %v1098
        %v1105 = vpack.c.bf16 %v1100, %v1100
        %v1106 = vpack.c.bf16 %v1102, %v1102
        %v1108 = vsel %vm821, %v801, 0
        %v1111 = vsel %vm821, %v1103, 0
        %1113 = vmatprep.subr.bf16.mxu0 0
        %1114 = vmatpush1.bf16.xpose.msra.mxu0 0
        %1115 = vmatprep.subr.bf16.mxu0 0
        %1116 = vmatpush1.bf16.xpose.msra.mxu0 0
        %1117 = vmatprep.subr.bf16.mxu0 0
        %1118 = vmatpush1.bf16.xpose.msra.mxu0 0
        %1119 = vmatprep.subr.bf16.mxu0 0
        %1120 = vmatpush1.bf16.xpose.msra.mxu0 0
        %1121 = vmatprep.subr.bf16.mxu0 0
        %1122 = vmatpush1.bf16.xpose.msra.mxu0 0
        %1123 = vmatprep.subr.bf16.mxu0 0
        %1124 = vmatpush1.bf16.xpose.msra.mxu0 0
        %1125 = vmatprep.subr.bf16.mxu0 0
        %1126 = vmatpush1.bf16.xpose.msra.mxu0 0
        %1127 = vmatprep.subr.bf16.mxu0 0
        %1128 = vmatpush1.bf16.xpose.msra.mxu0 %v1111
        %1129 = vmatprep.subr.bf16.mxu0 0
        %1130 = vmatpush2.bf16.xpose.msra.mxu0 0
        %1131 = vmatprep.subr.bf16.mxu0 0
        %1132 = vmatpush2.bf16.xpose.msra.mxu0 0
        %1133 = vmatprep.subr.bf16.mxu0 0
        %1134 = vmatpush2.bf16.xpose.msra.mxu0 0
        %1135 = vmatprep.subr.bf16.mxu0 0
        %1136 = vmatpush2.bf16.xpose.msra.mxu0 0
        %1137 = vmatprep.subr.bf16.mxu0 0
        %1138 = vmatpush2.bf16.xpose.msra.mxu0 0
        %1139 = vmatprep.subr.bf16.mxu0 0
        %1140 = vmatpush2.bf16.xpose.msra.mxu0 0
        %1141 = vmatprep.subr.bf16.mxu0 0
        %1142 = vmatpush2.bf16.xpose.msra.mxu0 0
        %1143 = vmatprep.subr.bf16.mxu0 0
        %1144 = vmatpush2.bf16.xpose.msra.mxu0 0
        %1145 = vmatprep.mubr.bf16.mxu0 0
        %1146 = vmatmul.mubr.bf16.gmra.mxu0 %v1108
        %v1147 = vpop.f32.mrf.mxu0
        %v1148 = vadd.f32 0.0, %v1147
        %v1149 = vpop.f32.mrf.mxu0
        %v1150 = vpop.f32.mrf.mxu0
        %v1151 = vpop.f32.mrf.mxu0
        %1152 = vdwg.mxu0
        %v1154 = vsel %vm821, %v802, 0
        %v1157 = vsel %vm821, %v1104, 0
        %1159 = vmatprep.subr.bf16.mxu0 0
        %1160 = vmatpush1.bf16.xpose.msra.mxu0 0
        %1161 = vmatprep.subr.bf16.mxu0 0
        %1162 = vmatpush1.bf16.xpose.msra.mxu0 0
        %1163 = vmatprep.subr.bf16.mxu0 0
        %1164 = vmatpush1.bf16.xpose.msra.mxu0 0
        %1165 = vmatprep.subr.bf16.mxu0 0
        %1166 = vmatpush1.bf16.xpose.msra.mxu0 0
        %1167 = vmatprep.subr.bf16.mxu0 0
        %1168 = vmatpush1.bf16.xpose.msra.mxu0 0
        %1169 = vmatprep.subr.bf16.mxu0 0
        %1170 = vmatpush1.bf16.xpose.msra.mxu0 0
        %1171 = vmatprep.subr.bf16.mxu0 0
        %1172 = vmatpush1.bf16.xpose.msra.mxu0 0
        %1173 = vmatprep.subr.bf16.mxu0 0
        %1174 = vmatpush1.bf16.xpose.msra.mxu0 %v1157
        %1175 = vmatprep.subr.bf16.mxu0 0
        %1176 = vmatpush2.bf16.xpose.msra.mxu0 0
        %1177 = vmatprep.subr.bf16.mxu0 0
        %1178 = vmatpush2.bf16.xpose.msra.mxu0 0
        %1179 = vmatprep.subr.bf16.mxu0 0
        %1180 = vmatpush2.bf16.xpose.msra.mxu0 0
        %1181 = vmatprep.subr.bf16.mxu0 0
        %1182 = vmatpush2.bf16.xpose.msra.mxu0 0
        %1183 = vmatprep.subr.bf16.mxu0 0
        %1184 = vmatpush2.bf16.xpose.msra.mxu0 0
        %1185 = vmatprep.subr.bf16.mxu0 0
        %1186 = vmatpush2.bf16.xpose.msra.mxu0 0
        %1187 = vmatprep.subr.bf16.mxu0 0
        %1188 = vmatpush2.bf16.xpose.msra.mxu0 0
        %1189 = vmatprep.subr.bf16.mxu0 0
        %1190 = vmatpush2.bf16.xpose.msra.mxu0 0
        %1191 = vmatprep.mubr.bf16.mxu0 0
        %1192 = vmatmul.mubr.bf16.gmra.mxu0 %v1154
        %v1193 = vpop.f32.mrf.mxu0
        %v1194 = vadd.f32 0.0, %v1193
        %v1195 = vpop.f32.mrf.mxu0
        %v1196 = vpop.f32.mrf.mxu0
        %v1197 = vpop.f32.mrf.mxu0
        %1198 = vdwg.mxu0
        %v1200 = vsel %vm821, %v803, 0
        %v1203 = vsel %vm821, %v1105, 0
        %1205 = vmatprep.subr.bf16.mxu0 0
        %1206 = vmatpush1.bf16.xpose.msra.mxu0 0
        %1207 = vmatprep.subr.bf16.mxu0 0
        %1208 = vmatpush1.bf16.xpose.msra.mxu0 0
        %1209 = vmatprep.subr.bf16.mxu0 0
        %1210 = vmatpush1.bf16.xpose.msra.mxu0 0
        %1211 = vmatprep.subr.bf16.mxu0 0
        %1212 = vmatpush1.bf16.xpose.msra.mxu0 0
        %1213 = vmatprep.subr.bf16.mxu0 0
        %1214 = vmatpush1.bf16.xpose.msra.mxu0 0
        %1215 = vmatprep.subr.bf16.mxu0 0
        %1216 = vmatpush1.bf16.xpose.msra.mxu0 0
        %1217 = vmatprep.subr.bf16.mxu0 0
        %1218 = vmatpush1.bf16.xpose.msra.mxu0 0
        %1219 = vmatprep.subr.bf16.mxu0 0
        %1220 = vmatpush1.bf16.xpose.msra.mxu0 %v1203
        %1221 = vmatprep.subr.bf16.mxu0 0
        %1222 = vmatpush2.bf16.xpose.msra.mxu0 0
        %1223 = vmatprep.subr.bf16.mxu0 0
        %1224 = vmatpush2.bf16.xpose.msra.mxu0 0
        %1225 = vmatprep.subr.bf16.mxu0 0
        %1226 = vmatpush2.bf16.xpose.msra.mxu0 0
        %1227 = vmatprep.subr.bf16.mxu0 0
        %1228 = vmatpush2.bf16.xpose.msra.mxu0 0
        %1229 = vmatprep.subr.bf16.mxu0 0
        %1230 = vmatpush2.bf16.xpose.msra.mxu0 0
        %1231 = vmatprep.subr.bf16.mxu0 0
        %1232 = vmatpush2.bf16.xpose.msra.mxu0 0
        %1233 = vmatprep.subr.bf16.mxu0 0
        %1234 = vmatpush2.bf16.xpose.msra.mxu0 0
        %1235 = vmatprep.subr.bf16.mxu0 0
        %1236 = vmatpush2.bf16.xpose.msra.mxu0 0
        %1237 = vmatprep.mubr.bf16.mxu0 0
        %1238 = vmatmul.mubr.bf16.gmra.mxu0 %v1200
        %v1239 = vpop.f32.mrf.mxu0
        %v1240 = vadd.f32 0.0, %v1239
        %v1241 = vpop.f32.mrf.mxu0
        %v1242 = vpop.f32.mrf.mxu0
        %v1243 = vpop.f32.mrf.mxu0
        %1244 = vdwg.mxu0
        %v1246 = vsel %vm821, %v804, 0
        %v1249 = vsel %vm821, %v1106, 0
        %1251 = vmatprep.subr.bf16.mxu0 0
        %1252 = vmatpush1.bf16.xpose.msra.mxu0 0
        %1253 = vmatprep.subr.bf16.mxu0 0
        %1254 = vmatpush1.bf16.xpose.msra.mxu0 0
        %1255 = vmatprep.subr.bf16.mxu0 0
        %1256 = vmatpush1.bf16.xpose.msra.mxu0 0
        %1257 = vmatprep.subr.bf16.mxu0 0
        %1258 = vmatpush1.bf16.xpose.msra.mxu0 0
        %1259 = vmatprep.subr.bf16.mxu0 0
        %1260 = vmatpush1.bf16.xpose.msra.mxu0 0
        %1261 = vmatprep.subr.bf16.mxu0 0
        %1262 = vmatpush1.bf16.xpose.msra.mxu0 0
        %1263 = vmatprep.subr.bf16.mxu0 0
        %1264 = vmatpush1.bf16.xpose.msra.mxu0 0
        %1265 = vmatprep.subr.bf16.mxu0 0
        %1266 = vmatpush1.bf16.xpose.msra.mxu0 %v1249
        %1267 = vmatprep.subr.bf16.mxu0 0
        %1268 = vmatpush2.bf16.xpose.msra.mxu0 0
        %1269 = vmatprep.subr.bf16.mxu0 0
        %1270 = vmatpush2.bf16.xpose.msra.mxu0 0
        %1271 = vmatprep.subr.bf16.mxu0 0
        %1272 = vmatpush2.bf16.xpose.msra.mxu0 0
        %1273 = vmatprep.subr.bf16.mxu0 0
        %1274 = vmatpush2.bf16.xpose.msra.mxu0 0
        %1275 = vmatprep.subr.bf16.mxu0 0
        %1276 = vmatpush2.bf16.xpose.msra.mxu0 0
        %1277 = vmatprep.subr.bf16.mxu0 0
        %1278 = vmatpush2.bf16.xpose.msra.mxu0 0
        %1279 = vmatprep.subr.bf16.mxu0 0
        %1280 = vmatpush2.bf16.xpose.msra.mxu0 0
        %1281 = vmatprep.subr.bf16.mxu0 0
        %1282 = vmatpush2.bf16.xpose.msra.mxu0 0
        %1283 = vmatprep.mubr.bf16.mxu0 0
        %1284 = vmatmul.mubr.bf16.gmra.mxu0 %v1246
        %v1285 = vpop.f32.mrf.mxu0
        %v1286 = vadd.f32 0.0, %v1285
        %v1287 = vpop.f32.mrf.mxu0
        %v1288 = vpop.f32.mrf.mxu0
        %v1289 = vpop.f32.mrf.mxu0
        %1290 = vdwg.mxu0
        %v1291 = vpack.c.bf16 %v1194, %v1148
        %v1292 = vpack.c.bf16 %v1286, %v1240
        %v1293 = vld [vmem:[%s6] sm:$0xf]
        %v1294 = vld [vmem:[%s6 + $0x4] sm:$0xf]
        %v1295 = vld [vmem:[%s6 + $0x8] sm:$0xf]
        %v1296 = vld [vmem:[%s6 + $0xc] sm:$0xf]
        %v1297 = vld [vmem:[%s7] sm:$0x1]
        %v1299 = vlaneseq
        %v1300 = vshrl.u32 %v1299, 7
        %v1301 = vsub.s32 0, %v1300
        %v1302 = vrot.slane %v1297, %v1301
        %1304 = vxpose.xlu0.c.b16.start [1/8] %v1291, 128
        %1305 = vxpose.xlu0.c.b16.cont [2/8] %v1292, 128
        %1306 = vxpose.xlu0.c.b16.cont [3/8] 0, 128
        %1307 = vxpose.xlu0.c.b16.cont [4/8] 0, 128
        %1308 = vxpose.xlu0.c.b16.cont [5/8] 0, 128
        %1309 = vxpose.xlu0.c.b16.cont [6/8] 0, 128
        %1310 = vxpose.xlu0.c.b16.cont [7/8] 0, 128
        %1311 = vxpose.xlu0.c.b16.end [8/8] 0, 128
        %v1312 = vpop.trf.xlu0
        %v1313 = vpop.trf.xlu0
        %v1314 = vpop.trf.xlu0
        %v1315 = vpop.trf.xlu0
        %v1316 = vpop.trf.xlu0
        %v1317 = vpop.trf.xlu0
        %v1318 = vpop.trf.xlu0
        %v1319 = vpop.trf.xlu0
        %v1324 = vunpack.c.l.b16 %v1293
        %v1325 = vunpack.c.l.b16 %v1294
        %v1326 = vunpack.c.l.b16 %v1295
        %v1327 = vunpack.c.l.b16 %v1296
        %v1328 = vpack.c.b16 %v1325, %v1324
        %v1329 = vpack.c.b16 %v1327, %v1326
        %v1331 = vsel %vm616, %v1312, 0
        %v1334 = vsel %vm616, %v1328, 0
        %v1337 = vsel %vm616, %v1329, 0
        %1339 = vmatprep.subr.bf16.mxu0 0
        %1340 = vmatpush1.bf16.xpose.msra.mxu0 0
        %1341 = vmatprep.subr.bf16.mxu0 0
        %1342 = vmatpush1.bf16.xpose.msra.mxu0 0
        %1343 = vmatprep.subr.bf16.mxu0 0
        %1344 = vmatpush1.bf16.xpose.msra.mxu0 0
        %1345 = vmatprep.subr.bf16.mxu0 0
        %1346 = vmatpush1.bf16.xpose.msra.mxu0 0
        %1347 = vmatprep.subr.bf16.mxu0 0
        %1348 = vmatpush1.bf16.xpose.msra.mxu0 0
        %1349 = vmatprep.subr.bf16.mxu0 0
        %1350 = vmatpush1.bf16.xpose.msra.mxu0 0
        %1351 = vmatprep.subr.bf16.mxu0 0
        %1352 = vmatpush1.bf16.xpose.msra.mxu0 %v1337
        %1353 = vmatprep.subr.bf16.mxu0 0
        %1354 = vmatpush1.bf16.xpose.msra.mxu0 %v1334
        %1355 = vmatprep.subr.bf16.mxu0 0
        %1356 = vmatpush2.bf16.xpose.msra.mxu0 0
        %1357 = vmatprep.subr.bf16.mxu0 0
        %1358 = vmatpush2.bf16.xpose.msra.mxu0 0
        %1359 = vmatprep.subr.bf16.mxu0 0
        %1360 = vmatpush2.bf16.xpose.msra.mxu0 0
        %1361 = vmatprep.subr.bf16.mxu0 0
        %1362 = vmatpush2.bf16.xpose.msra.mxu0 0
        %1363 = vmatprep.subr.bf16.mxu0 0
        %1364 = vmatpush2.bf16.xpose.msra.mxu0 0
        %1365 = vmatprep.subr.bf16.mxu0 0
        %1366 = vmatpush2.bf16.xpose.msra.mxu0 0
        %1367 = vmatprep.subr.bf16.mxu0 0
        %1368 = vmatpush2.bf16.xpose.msra.mxu0 0
        %1369 = vmatprep.subr.bf16.mxu0 0
        %1370 = vmatpush2.bf16.xpose.msra.mxu0 0
        %1371 = vmatprep.mubr.bf16.mxu0 0
        %1372 = vmatmul.mubr.bf16.gmra.mxu0 %v1331
        %v1373 = vpop.f32.mrf.mxu0
        %v1374 = vadd.f32 %v1302, %v1373
        %v1375 = vpop.f32.mrf.mxu0
        %v1376 = vpop.f32.mrf.mxu0
        %v1377 = vpop.f32.mrf.mxu0
        %1378 = vdwg.mxu0
        %v1379 = vadd.f32 %v535, %v1374
        %v1380 = vld [vmem:[%s8] sm:$0x1]
        %v1381 = vld [vmem:[%s9] sm:$0x1]
        %v1382 = vsel %vm616, %v1379, 0.0
        %1383 = vadd.xlane.f32.xlu0 %v1382
        %v1384 = vpop.xlane.xlu0 %1383
        %v1385 = vmul.f32 %v1379, %v1379
        %v1386 = vsel %vm616, %v1385, 0.0
        %1387 = vadd.xlane.f32.xlu0 %v1386
        %v1388 = vpop.xlane.xlu0 %1387
        %v1389 = vrcp.pop 32.0
        %v1390 = vmul.f32 %v1384, %v1389
        %v1391 = vmul.f32 %v1388, %v1389
        %v1392 = vmul.f32 %v1390, %v1390
        %v1393 = vsub.f32 %v1391, %v1392
        %v1394 = vsub.f32 %v1379, %v1390
        %v1395 = vadd.f32 %v1393, 1e-05
        %v1396 = vrsqrt.pop %v1395
        %v1397 = vmul.f32 %v1394, %v1396
        %v1399 = vlaneseq
        %v1400 = vshrl.u32 %v1399, 7
        %v1401 = vsub.s32 0, %v1400
        %v1402 = vrot.slane %v1380, %v1401
        %v1404 = vmul.f32 %v1397, %v1402
        %v1406 = vlaneseq
        %v1407 = vshrl.u32 %v1406, 7
        %v1408 = vsub.s32 0, %v1407
        %v1409 = vrot.slane %v1381, %v1408
        %v1411 = vadd.f32 %v1404, %v1409
        %v1412 = vpack.c.bf16 %v1411, %v1411
        %v1413 = vld [vmem:[%s10] sm:$0xf]
        %v1414 = vld [vmem:[%s10 + $0x4] sm:$0xf]
        %v1415 = vld [vmem:[%s10 + $0x8] sm:$0xf]
        %v1416 = vld [vmem:[%s10 + $0xc] sm:$0xf]
        %v1417 = vld [vmem:[%s10 + $0x10] sm:$0xf]
        %v1418 = vld [vmem:[%s10 + $0x14] sm:$0xf]
        %v1419 = vld [vmem:[%s10 + $0x18] sm:$0xf]
        %v1420 = vld [vmem:[%s10 + $0x1c] sm:$0xf]
        %v1421 = vld [vmem:[%s11] sm:$0x1]
        %v1423 = vlaneseq
        %v1424 = vshrl.u32 %v1423, 7
        %v1425 = vsub.s32 0, %v1424
        %v1426 = vrot.slane %v1421, %v1425
        %v1436 = vunpack.c.l.b16 %v1413
        %v1437 = vunpack.c.l.b16 %v1414
        %v1438 = vunpack.c.l.b16 %v1415
        %v1439 = vunpack.c.l.b16 %v1416
        %v1440 = vunpack.c.l.b16 %v1417
        %v1441 = vunpack.c.l.b16 %v1418
        %v1442 = vunpack.c.l.b16 %v1419
        %v1443 = vunpack.c.l.b16 %v1420
        %v1444 = vpack.c.b16 %v1437, %v1436
        %v1445 = vpack.c.b16 %v1439, %v1438
        %v1446 = vpack.c.b16 %v1441, %v1440
        %v1447 = vpack.c.b16 %v1443, %v1442
        %v1449 = vsel %vm616, %v1412, 0
        %v1452 = vsel %vm616, %v1444, 0
        %v1455 = vsel %vm616, %v1445, 0
        %v1458 = vsel %vm616, %v1446, 0
        %v1461 = vsel %vm616, %v1447, 0
        %1463 = vmatprep.subr.bf16.mxu0 0
        %1464 = vmatpush1.bf16.xpose.msra.mxu0 0
        %1465 = vmatprep.subr.bf16.mxu0 0
        %1466 = vmatpush1.bf16.xpose.msra.mxu0 0
        %1467 = vmatprep.subr.bf16.mxu0 0
        %1468 = vmatpush1.bf16.xpose.msra.mxu0 0
        %1469 = vmatprep.subr.bf16.mxu0 0
        %1470 = vmatpush1.bf16.xpose.msra.mxu0 0
        %1471 = vmatprep.subr.bf16.mxu0 0
        %1472 = vmatpush1.bf16.xpose.msra.mxu0 %v1461
        %1473 = vmatprep.subr.bf16.mxu0 0
        %1474 = vmatpush1.bf16.xpose.msra.mxu0 %v1458
        %1475 = vmatprep.subr.bf16.mxu0 0
        %1476 = vmatpush1.bf16.xpose.msra.mxu0 %v1455
        %1477 = vmatprep.subr.bf16.mxu0 0
        %1478 = vmatpush1.bf16.xpose.msra.mxu0 %v1452
        %1479 = vmatprep.subr.bf16.mxu0 0
        %1480 = vmatpush2.bf16.xpose.msra.mxu0 0
        %1481 = vmatprep.subr.bf16.mxu0 0
        %1482 = vmatpush2.bf16.xpose.msra.mxu0 0
        %1483 = vmatprep.subr.bf16.mxu0 0
        %1484 = vmatpush2.bf16.xpose.msra.mxu0 0
        %1485 = vmatprep.subr.bf16.mxu0 0
        %1486 = vmatpush2.bf16.xpose.msra.mxu0 0
        %1487 = vmatprep.subr.bf16.mxu0 0
        %1488 = vmatpush2.bf16.xpose.msra.mxu0 0
        %1489 = vmatprep.subr.bf16.mxu0 0
        %1490 = vmatpush2.bf16.xpose.msra.mxu0 0
        %1491 = vmatprep.subr.bf16.mxu0 0
        %1492 = vmatpush2.bf16.xpose.msra.mxu0 0
        %1493 = vmatprep.subr.bf16.mxu0 0
        %1494 = vmatpush2.bf16.xpose.msra.mxu0 0
        %1495 = vmatprep.mubr.bf16.mxu0 0
        %1496 = vmatmul.mubr.bf16.gmra.mxu0 %v1449
        %v1497 = vpop.f32.mrf.mxu0
        %v1498 = vadd.f32 %v1426, %v1497
        %v1499 = vpop.f32.mrf.mxu0
        %v1500 = vpop.f32.mrf.mxu0
        %v1501 = vpop.f32.mrf.mxu0
        %1502 = vdwg.mxu0
        %v1503 = vmax.f32 %v1498, 0.0
        %v1504 = vpack.c.bf16 %v1503, %v1503
        %v1505 = vld [vmem:[%s12] sm:$0xf]
        %v1506 = vld [vmem:[%s12 + $0x4] sm:$0xf]
        %v1507 = vld [vmem:[%s12 + $0x8] sm:$0xf]
        %v1508 = vld [vmem:[%s12 + $0xc] sm:$0xf]
        %v1509 = vld [vmem:[%s13] sm:$0x1]
        %v1511 = vlaneseq
        %v1512 = vshrl.u32 %v1511, 7
        %v1513 = vsub.s32 0, %v1512
        %v1514 = vrot.slane %v1509, %v1513
        %v1520 = vunpack.c.l.b16 %v1505
        %v1521 = vunpack.c.l.b16 %v1506
        %v1522 = vunpack.c.l.b16 %v1507
        %v1523 = vunpack.c.l.b16 %v1508
        %v1524 = vpack.c.b16 %v1521, %v1520
        %v1525 = vpack.c.b16 %v1523, %v1522
        %vm1526 = vcmask 523264
        %v1528 = vsel %vm1526, %v1504, 0
        %v1531 = vsel %vm1526, %v1524, 0
        %v1534 = vsel %vm1526, %v1525, 0
        %1536 = vmatprep.subr.bf16.mxu0 0
        %1537 = vmatpush1.bf16.xpose.msra.mxu0 0
        %1538 = vmatprep.subr.bf16.mxu0 0
        %1539 = vmatpush1.bf16.xpose.msra.mxu0 0
        %1540 = vmatprep.subr.bf16.mxu0 0
        %1541 = vmatpush1.bf16.xpose.msra.mxu0 0
        %1542 = vmatprep.subr.bf16.mxu0 0
        %1543 = vmatpush1.bf16.xpose.msra.mxu0 0
        %1544 = vmatprep.subr.bf16.mxu0 0
        %1545 = vmatpush1.bf16.xpose.msra.mxu0 0
        %1546 = vmatprep.subr.bf16.mxu0 0
        %1547 = vmatpush1.bf16.xpose.msra.mxu0 0
        %1548 = vmatprep.subr.bf16.mxu0 0
        %1549 = vmatpush1.bf16.xpose.msra.mxu0 %v1534
        %1550 = vmatprep.subr.bf16.mxu0 0
        %1551 = vmatpush1.bf16.xpose.msra.mxu0 %v1531
        %1552 = vmatprep.subr.bf16.mxu0 0
        %1553 = vmatpush2.bf16.xpose.msra.mxu0 0
        %1554 = vmatprep.subr.bf16.mxu0 0
        %1555 = vmatpush2.bf16.xpose.msra.mxu0 0
        %1556 = vmatprep.subr.bf16.mxu0 0
        %1557 = vmatpush2.bf16.xpose.msra.mxu0 0
        %1558 = vmatprep.subr.bf16.mxu0 0
        %1559 = vmatpush2.bf16.xpose.msra.mxu0 0
        %1560 = vmatprep.subr.bf16.mxu0 0
        %1561 = vmatpush2.bf16.xpose.msra.mxu0 0
        %1562 = vmatprep.subr.bf16.mxu0 0
        %1563 = vmatpush2.bf16.xpose.msra.mxu0 0
        %1564 = vmatprep.subr.bf16.mxu0 0
        %1565 = vmatpush2.bf16.xpose.msra.mxu0 0
        %1566 = vmatprep.subr.bf16.mxu0 0
        %1567 = vmatpush2.bf16.xpose.msra.mxu0 0
        %1568 = vmatprep.mubr.bf16.mxu0 0
        %1569 = vmatmul.mubr.bf16.gmra.mxu0 %v1528
        %v1570 = vpop.f32.mrf.mxu0
        %v1571 = vadd.f32 %v1514, %v1570
        %v1572 = vpop.f32.mrf.mxu0
        %v1573 = vpop.f32.mrf.mxu0
        %v1574 = vpop.f32.mrf.mxu0
        %1575 = vdwg.mxu0
        %v1576 = vadd.f32 %v1411, %v1571
        %v1577 = vld [vmem:[%s14] sm:$0x1]
        %v1578 = vld [vmem:[%s15] sm:$0x1]
        %v1579 = vsel %vm616, %v1576, 0.0
        %1580 = vadd.xlane.f32.xlu0 %v1579
        %v1581 = vpop.xlane.xlu0 %1580
        %v1582 = vmul.f32 %v1576, %v1576
        %v1583 = vsel %vm616, %v1582, 0.0
        %1584 = vadd.xlane.f32.xlu0 %v1583
        %v1585 = vpop.xlane.xlu0 %1584
        %v1586 = vmul.f32 %v1581, %v1389
        %v1587 = vmul.f32 %v1585, %v1389
        %v1588 = vmul.f32 %v1586, %v1586
        %v1589 = vsub.f32 %v1587, %v1588
        %v1590 = vsub.f32 %v1576, %v1586
        %v1591 = vadd.f32 %v1589, 1e-05
        %v1592 = vrsqrt.pop %v1591
        %v1593 = vmul.f32 %v1590, %v1592
        %v1595 = vlaneseq
        %v1596 = vshrl.u32 %v1595, 7
        %v1597 = vsub.s32 0, %v1596
        %v1598 = vrot.slane %v1577, %v1597
        %v1600 = vmul.f32 %v1593, %v1598
        %v1602 = vlaneseq
        %v1603 = vshrl.u32 %v1602, 7
        %v1604 = vsub.s32 0, %v1603
        %v1605 = vrot.slane %v1578, %v1604
        %v1607 = vadd.f32 %v1600, %v1605
        %1608 = vst.msk [vmem:[%s525] sm:$0xff] %vm616, %v1607
        %s1609 = sand.u32 %s384, 1
        %s1610 = scalar_lea.sflag [#allocation3], %s1609
        %s1611 = sand.u32 %s384, 1
        %s1612 = smul.addr %s1611, 8
        %s1613 = scalar_lea.vmem [#allocation2], %s1612
        // Predicated region
        $region85: #{tpu_custom_call.1} parent=83 // pred_check
          %p1614 = pneg %p394
        $region86: #{tpu_custom_call.1} parent=83 // pred_check_branch
          %1616 = sbr.rel (%p1614) target = $region88
        $region87: #{tpu_custom_call.1} parent=83 // pred_region
          %s1618 = ssub.s32 128, 128
          %1619 = vsyncadd %s1610, %s1618
          %s1620 = smul.addr %s30, 128
          %s1621 = scalar_lea.hbm %s16, %s1620
          %s1623 = sshll.u32 %s1613, 4
          %s1624 = int_to_ptr.vmem [resolvable:$true] %s1623
          %1626 = dma.vmem_to_hbm [thread:$0]  %s1624, 128, %s1621, %s1610
        $region88: #{tpu_custom_call.1} parent=83 // pred_fallthru
          _
      $region84: #{tpu_custom_call.1} parent=5 // pred_fallthru
        _
      %p1627 = scmp.le.s32.totalorder 2, %s25
      // Predicated region
      $region89: #{tpu_custom_call.1} parent=5 // pred_check
        %p1628 = pneg %p1627
      $region90: #{tpu_custom_call.1} parent=5 // pred_check_branch
        %1630 = sbr.rel (%p1628) target = $region92
      $region91: #{tpu_custom_call.1} parent=5 // pred_region
        %s1631 = ssub.s32 %s25, 2
        // Predicated region
        $region93: #{tpu_custom_call.1} parent=91 // pred_check
          %p1632 = pneg %p400
        $region94: #{tpu_custom_call.1} parent=91 // pred_check_branch
          %1634 = sbr.rel (%p1632) target = $region96
        $region95: #{tpu_custom_call.1} parent=91 // pred_region
          %s1635 = sand.u32 %s385, 1
          %s1636 = scalar_lea.sflag [#allocation3], %s1635
          %s1637 = sand.u32 %s385, 1
          %s1638 = smul.addr %s1637, 8
          %s1639 = scalar_lea.vmem [#allocation2], %s1638
          %1640 = dma.done %s1636, 128
        $region96: #{tpu_custom_call.1} parent=91 // pred_fallthru
          _
      $region92: #{tpu_custom_call.1} parent=5 // pred_fallthru
        _
    $region6: #{tpu_custom_call.1} parent=1 // loop_footer
      %s29 = sadd.s32 1, %s25
    $region7: #{tpu_custom_call.1} parent=1 // loop_footer_branch
      %24 = sbr.rel target = $region3
    $region8: #{tpu_custom_call.1} parent=1 // loop_exit
      _
    %1641 = vsyncpa [#allocation3], 1
    %s1642 = scalar_lea.sflag [#allocation3], 1
    %1643 = vsyncpa %s1642, 1

</llo_original>
